<compile_context>
chip_gen: v6e
topology: v6e:2x2x1
jax: 0.10.0
libtpu: 0.0.40
codegen_flags: <defaults>
</compile_context>

<pallas_src>
import jax
import jax.numpy as jnp
from jax.experimental import pallas as pl
from jax.experimental.pallas import tpu as pltpu


def _stgcn_block_kernel(xg_ref, xr_ref, mbd_ref, convw_ref, wres_ref,
                        gcn_aff_ref, out_aff_ref, out_ref, hpad_ref):
    T = xg_ref.shape[0]
    K = convw_ref.shape[0]
    pad = (K - 1) // 2
    QP = mbd_ref.shape[1]

    # --- GraphConvolution: adj and W pre-fused per q, batched block-diagonally.
    #     (T, Q*V) @ (Q*V, Q*P) -> (T, Q*P); lane = q*P + p holds a2[b,p,t,q].
    g = jnp.dot(xg_ref[...], mbd_ref[...], preferred_element_type=jnp.float32)

    # --- BN1 + ReLU, then tcn's leading BN2 + ReLU (folded, per-lane, q-tiled).
    h = jnp.maximum(g * gcn_aff_ref[0:1, :] + gcn_aff_ref[1:2, :], 0.0)
    h = jnp.maximum(h * gcn_aff_ref[2:3, :] + gcn_aff_ref[3:4, :], 0.0)

    # --- temporal conv (K,1), padding (pad,0), stride 1:
    #     zero-padded VMEM scratch + K shifted (T,256)@(256,256) matmuls.
    #     Pad rows are re-zeroed every step: with a "parallel" grid each core
    #     has its own scratch, so a first-step-only guard would be unsafe.
    zeros_pad = jnp.zeros((pad, QP), dtype=jnp.float32)
    hpad_ref[0:pad, :] = zeros_pad
    hpad_ref[T + pad:T + 2 * pad, :] = zeros_pad
    hpad_ref[pad:pad + T, :] = h

    acc = jnp.dot(hpad_ref[0:T, :], convw_ref[0, :, :],
                  preferred_element_type=jnp.float32)
    for k in range(1, K):  # static unroll over taps
        acc = acc + jnp.dot(hpad_ref[k:k + T, :], convw_ref[k, :, :],
                            preferred_element_type=jnp.float32)

    # --- residual 1x1 conv, batched block-diagonally over q (lane = q*O + o).
    res = jnp.dot(xr_ref[...], wres_ref[...], preferred_element_type=jnp.float32)

    # --- BN3 (conv & residual biases folded into the shift) + add + final ReLU.
    out = acc * out_aff_ref[0:1, :] + res + out_aff_ref[1:2, :]
    out_ref[...] = jnp.maximum(out, 0.0).astype(out_ref.dtype)


def stgcn_block_forward(x, adj, w_gcn, bn1, bn2, conv_w, conv_b, bn3, res_w, res_b,
                        *, eps=1e-5):
    """STGCNBlock forward (stride=1, residual=True), inference-mode BatchNorm.

    x:       (B, C_in, T, V)
    adj:     (V, V, C_in)           GraphConvolution.adj_matrix
    w_gcn:   (V, C_in, C_out)       GraphConvolution.weight
    bn1/2/3: (gamma, beta, running_mean, running_var), each (C,)
    conv_w:  (C_out, C_out, 9, 1),  conv_b: (C_out,)    temporal conv
    res_w:   (C_out, C_in, 1, 1),   res_b:  (C_out,)    residual 1x1 conv
    returns  (B, C_out, T, V) — same layout as the PyTorch module.
    """
    B, C_in, T, V = x.shape
    C_out = w_gcn.shape[2]
    assert C_in == C_out == V, "STGCNBlock einsums require in_channels == out_channels == V"
    K = conv_w.shape[2]
    PAD = (K - 1) // 2
    f32 = jnp.float32
    Q = C_out                      # the per-vertex / gcn-output-channel axis carried in lanes
    QV, QP, QO = Q * V, Q * C_in, Q * C_out

    # ---- fold BatchNorm (inference) into per-channel scale/shift, tile over q ----
    def fold(bn):
        gamma, beta, mean, var = bn
        s = gamma / jnp.sqrt(var + eps)
        return s.astype(f32), (beta - mean * s).astype(f32)

    s1, h1 = fold(bn1)
    s2, h2 = fold(bn2)
    s3, h3 = fold(bn3)
    gcn_aff = jnp.stack([jnp.tile(s1, Q), jnp.tile(h1, Q),
                         jnp.tile(s2, Q), jnp.tile(h2, Q)], axis=0)          # (4, Q*P)
    out_aff = jnp.stack([jnp.tile(s3, Q),
                         jnp.tile(s3 * conv_b + h3 + res_b, Q)], axis=0)     # (2, Q*O)

    # ---- weight prep (trace-time XLA, outside the hot loop) ----
    eye_q = jnp.eye(Q, dtype=f32)

    # Fused GCN weight M[q] = adj[:,:,q] @ w_gcn[:,:,q], laid out block-diagonally.
    m = jnp.einsum('uvq,vpq->qup', adj.astype(f32), w_gcn.astype(f32))       # (Q, V, P)
    m_bd = (m[:, :, None, :] * eye_q[:, None, :, None]).reshape(QV, QP)      # (Q*V, Q*P)

    # Temporal-conv taps, block-diagonal per tap (same (P,O) block for every q).
    convw_t = jnp.transpose(conv_w[:, :, :, 0], (2, 1, 0)).astype(f32)       # (K, P, O)
    convw_bd = (convw_t[:, None, :, None, :] * eye_q[None, :, None, :, None]
                ).reshape(K, QP, QO)                                         # (K, Q*P, Q*O)

    # Residual 1x1 weight, block-diagonal (same (C,O) block for every q).
    wres_t = jnp.transpose(res_w[:, :, 0, 0], (1, 0)).astype(f32)            # (C_in, O)
    wres_bd = (wres_t[None, :, None, :] * eye_q[:, None, :, None]).reshape(QP, QO)

    # ---- activation layout plumbing: lane-dense (T, 256) slabs per batch ----
    xg = jnp.transpose(x, (0, 2, 1, 3)).reshape(B, T, QV).astype(f32)  # [b,t,q*V+v] = x[b,q,t,v]
    xr = jnp.transpose(x, (0, 2, 3, 1)).reshape(B, T, QP).astype(f32)  # [b,t,q*C+c] = x[b,c,t,q]

    y_slab = pl.pallas_call(
        _stgcn_block_kernel,
        out_shape=jax.ShapeDtypeStruct((B, T, QO), f32),
        grid_spec=pltpu.PrefetchScalarGridSpec(
            num_scalar_prefetch=0,
            grid=(B,),                                    # 2 steps; megacore splits them on v7x
            in_specs=[
                pl.BlockSpec((None, T, QV), lambda b: (b, 0, 0)),   # x slab for GCN
                pl.BlockSpec((None, T, QP), lambda b: (b, 0, 0)),   # x slab for residual
                pl.BlockSpec((QV, QP), lambda b: (0, 0)),           # fused GCN weight (resident)
                pl.BlockSpec((K, QP, QO), lambda b: (0, 0, 0)),     # conv taps (resident)
                pl.BlockSpec((QP, QO), lambda b: (0, 0)),           # residual weight (resident)
                pl.BlockSpec((4, QP), lambda b: (0, 0)),            # folded bn1/bn2
                pl.BlockSpec((2, QO), lambda b: (0, 0)),            # folded bn3 + biases
            ],
            out_specs=pl.BlockSpec((None, T, QO), lambda b: (b, 0, 0)),
            scratch_shapes=[pltpu.VMEM((T + 2 * PAD, QP), f32)],    # zero-padded H
        ),
        compiler_params=pltpu.CompilerParams(
            dimension_semantics=("parallel",),
        ),
    )(xg, xr, m_bd, convw_bd, wres_bd, gcn_aff, out_aff)

    # y_slab[b, t, q*O + o] = out[b, o, t, q]  ->  (B, C_out, T, V)
    return jnp.transpose(y_slab.reshape(B, T, Q, C_out), (0, 3, 1, 2))


def _stgcn_reference(x, adj, w_gcn, bn1, bn2, conv_w, conv_b, bn3, res_w, res_b, eps=1e-5):
    """Pure-JAX mirror of the PyTorch module (eval-mode BatchNorm)."""
    hi = jax.lax.Precision.HIGHEST

    def bn(t, p):
        g, b, m, v = p
        s = g / jnp.sqrt(v + eps)
        return t * s[None, :, None, None] + (b - m * s)[None, :, None, None]

    a1 = jnp.einsum('bctv,vwc->bctw', x, adj, precision=hi)
    a2 = jnp.einsum('bctv,vwc->bwtc', a1, w_gcn, precision=hi)
    h = jax.nn.relu(bn(a2, bn1))
    h = jax.nn.relu(bn(h, bn2))
    T = x.shape[2]
    hp = jnp.pad(h, ((0, 0), (0, 0), (4, 4), (0, 0)))
    conv = conv_b[None, :, None, None] + sum(
        jnp.einsum('bptw,op->botw', hp[:, :, k:k + T, :], conv_w[:, :, k, 0], precision=hi)
        for k in range(conv_w.shape[2]))
    y = bn(conv, bn3)
    res = jnp.einsum('bctv,oc->botv', x, res_w[:, :, 0, 0], precision=hi) \
        + res_b[None, :, None, None]
    return jax.nn.relu(y + res)


if __name__ == "__main__":
    B, T = 2, 8
    C = V = 16   # module structure forces in_channels == out_channels == num_vertices

    key = jax.random.PRNGKey(0)
    keys = jax.random.split(key, 10)
    x = jax.random.normal(keys[0], (B, C, T, V), jnp.float32)
    adj = 0.2 * jax.random.normal(keys[1], (V, V, C), jnp.float32)
    w_gcn = 0.2 * jax.random.normal(keys[2], (V, C, C), jnp.float32)
    conv_w = 0.05 * jax.random.normal(keys[3], (C, C, 9, 1), jnp.float32)
    conv_b = 0.1 * jax.random.normal(keys[4], (C,), jnp.float32)
    res_w = 0.2 * jax.random.normal(keys[5], (C, C, 1, 1), jnp.float32)
    res_b = 0.1 * jax.random.normal(keys[6], (C,), jnp.float32)

    def make_bn(k):
        k1, k2, k3, k4 = jax.random.split(k, 4)
        gamma = 1.0 + 0.1 * jax.random.normal(k1, (C,), jnp.float32)
        beta = 0.1 * jax.random.normal(k2, (C,), jnp.float32)
        mean = 0.1 * jax.random.normal(k3, (C,), jnp.float32)
        var = 1.0 + 0.5 * jax.random.uniform(k4, (C,), jnp.float32)
        return gamma, beta, mean, var

    bn1, bn2, bn3 = make_bn(keys[7]), make_bn(keys[8]), make_bn(keys[9])

    fwd = jax.jit(stgcn_block_forward)
    out = fwd(x, adj, w_gcn, bn1, bn2, conv_w, conv_b, bn3, res_w, res_b)
    out = jax.block_until_ready(out)

    ref = _stgcn_reference(x, adj, w_gcn, bn1, bn2, conv_w, conv_b, bn3, res_w, res_b)
    assert out.shape == ref.shape == (B, C, T, V)
    scale = float(jnp.max(jnp.abs(ref)))
    max_err = float(jnp.max(jnp.abs(out - ref)))
    # MXU vs XLA accumulation order / precision differ slightly; check normalized error.
    assert max_err <= 2e-2 * max(1.0, scale), f"mismatch: max_err={max_err}, scale={scale}"
    print("KERNEL_OK")
</pallas_src>

<mosaic_0001>
module attributes {stable_mosaic.version = 11 : i64} {
  func.func @_stgcn_block_kernel(%arg0: i32, %arg1: memref<1x8x256xf32, #tpu.memory_space<vmem>>, %arg2: memref<1x8x256xf32, #tpu.memory_space<vmem>>, %arg3: memref<256x256xf32, #tpu.memory_space<vmem>>, %arg4: memref<9x256x256xf32, #tpu.memory_space<vmem>>, %arg5: memref<256x256xf32, #tpu.memory_space<vmem>>, %arg6: memref<4x256xf32, #tpu.memory_space<vmem>>, %arg7: memref<2x256xf32, #tpu.memory_space<vmem>>, %arg8: memref<1x8x256xf32, #tpu.memory_space<vmem>>, %arg9: memref<16x256xf32, #tpu.memory_space<vmem>>) attributes {dimension_semantics = [#tpu.dimension_semantics<parallel>], iteration_bounds = array<i64: 2>, scalar_prefetch = 0 : i64, scratch_operands = 1 : i64, tpu.core_type = #tpu.core_type<tc>, window_params = [{transform_indices = @transform_0, window_bounds = array<i64: 1, 8, 256>}, {transform_indices = @transform_1, window_bounds = array<i64: 1, 8, 256>}, {pipeline_mode = #tpu.pipeline_mode<synchronous>, transform_indices = @transform_2, window_bounds = array<i64: 256, 256>}, {pipeline_mode = #tpu.pipeline_mode<synchronous>, transform_indices = @transform_3, window_bounds = array<i64: 9, 256, 256>}, {pipeline_mode = #tpu.pipeline_mode<synchronous>, transform_indices = @transform_4, window_bounds = array<i64: 256, 256>}, {pipeline_mode = #tpu.pipeline_mode<synchronous>, transform_indices = @transform_5, window_bounds = array<i64: 4, 256>}, {pipeline_mode = #tpu.pipeline_mode<synchronous>, transform_indices = @transform_6, window_bounds = array<i64: 2, 256>}, {transform_indices = @transform_7, window_bounds = array<i64: 1, 8, 256>}]} {
    %c0 = arith.constant 0 : index
    %c0_0 = arith.constant 0 : index
    %c0_1 = arith.constant 0 : index
    %0 = vector.load %arg1[%c0, %c0_0, %c0_1] : memref<1x8x256xf32, #tpu.memory_space<vmem>>, vector<1x8x256xf32>
    %1 = vector.shape_cast %0 : vector<1x8x256xf32> to vector<8x256xf32>
    %c0_2 = arith.constant 0 : index
    %c0_3 = arith.constant 0 : index
    %2 = vector.load %arg3[%c0_2, %c0_3] : memref<256x256xf32, #tpu.memory_space<vmem>>, vector<256x256xf32>
    %cst = arith.constant dense<0.000000e+00> : vector<8x256xf32>
    %3 = tpu.matmul %1, %2, %cst {dimension_numbers = #tpu.dot_dimension_numbers<[1], [0], [0], [1], [0, 0, 1, 1], [], []>} : vector<8x256xf32>, vector<256x256xf32>, vector<8x256xf32> -> vector<8x256xf32>
    %c0_4 = arith.constant 0 : index
    %c0_5 = arith.constant 0 : index
    %4 = vector.load %arg6[%c0_4, %c0_5] : memref<4x256xf32, #tpu.memory_space<vmem>>, vector<1x256xf32>
    %5 = vector.broadcast %4 : vector<1x256xf32> to vector<8x256xf32>
    %6 = arith.mulf %3, %5 : vector<8x256xf32>
    %c1 = arith.constant 1 : index
    %c0_6 = arith.constant 0 : index
    %7 = vector.load %arg6[%c1, %c0_6] : memref<4x256xf32, #tpu.memory_space<vmem>>, vector<1x256xf32>
    %8 = vector.broadcast %7 : vector<1x256xf32> to vector<8x256xf32>
    %9 = arith.addf %6, %8 : vector<8x256xf32>
    %cst_7 = arith.constant 0.000000e+00 : f32
    %10 = vector.broadcast %cst_7 : f32 to vector<8x256xf32>
    %11 = arith.maximumf %9, %10 : vector<8x256xf32>
    %c2 = arith.constant 2 : index
    %c0_8 = arith.constant 0 : index
    %12 = vector.load %arg6[%c2, %c0_8] : memref<4x256xf32, #tpu.memory_space<vmem>>, vector<1x256xf32>
    %13 = vector.broadcast %12 : vector<1x256xf32> to vector<8x256xf32>
    %14 = arith.mulf %11, %13 : vector<8x256xf32>
    %c3 = arith.constant 3 : index
    %c0_9 = arith.constant 0 : index
    %15 = vector.load %arg6[%c3, %c0_9] : memref<4x256xf32, #tpu.memory_space<vmem>>, vector<1x256xf32>
    %16 = vector.broadcast %15 : vector<1x256xf32> to vector<8x256xf32>
    %17 = arith.addf %14, %16 : vector<8x256xf32>
    %cst_10 = arith.constant 0.000000e+00 : f32
    %18 = vector.broadcast %cst_10 : f32 to vector<8x256xf32>
    %19 = arith.maximumf %17, %18 : vector<8x256xf32>
    %cst_11 = arith.constant 0.000000e+00 : f32
    %20 = vector.broadcast %cst_11 : f32 to vector<4x256xf32>
    %c0_12 = arith.constant 0 : index
    %c0_13 = arith.constant 0 : index
    %21 = vector.load %arg9[%c0_12, %c0_13] : memref<16x256xf32, #tpu.memory_space<vmem>>, vector<4x256xf32>
    tpu.vector_store %arg9[%c0_12, %c0_13], %20 {strides = array<i32>} : memref<16x256xf32, #tpu.memory_space<vmem>>, vector<4x256xf32>,
    %c12 = arith.constant 12 : index
    %c0_14 = arith.constant 0 : index
    %22 = vector.load %arg9[%c12, %c0_14] : memref<16x256xf32, #tpu.memory_space<vmem>>, vector<4x256xf32>
    tpu.vector_store %arg9[%c12, %c0_14], %20 {strides = array<i32>} : memref<16x256xf32, #tpu.memory_space<vmem>>, vector<4x256xf32>,
    %c4 = arith.constant 4 : index
    %c0_15 = arith.constant 0 : index
    %23 = vector.load %arg9[%c4, %c0_15] : memref<16x256xf32, #tpu.memory_space<vmem>>, vector<8x256xf32>
    tpu.vector_store %arg9[%c4, %c0_15], %19 {strides = array<i32>} : memref<16x256xf32, #tpu.memory_space<vmem>>, vector<8x256xf32>,
    %c0_16 = arith.constant 0 : index
    %c0_17 = arith.constant 0 : index
    %24 = vector.load %arg9[%c0_16, %c0_17] : memref<16x256xf32, #tpu.memory_space<vmem>>, vector<8x256xf32>
    %c0_18 = arith.constant 0 : index
    %c0_19 = arith.constant 0 : index
    %c0_20 = arith.constant 0 : index
    %25 = vector.load %arg4[%c0_18, %c0_19, %c0_20] : memref<9x256x256xf32, #tpu.memory_space<vmem>>, vector<1x256x256xf32>
    %26 = vector.shape_cast %25 : vector<1x256x256xf32> to vector<256x256xf32>
    %cst_21 = arith.constant dense<0.000000e+00> : vector<8x256xf32>
    %27 = tpu.matmul %24, %26, %cst_21 {dimension_numbers = #tpu.dot_dimension_numbers<[1], [0], [0], [1], [0, 0, 1, 1], [], []>} : vector<8x256xf32>, vector<256x256xf32>, vector<8x256xf32> -> vector<8x256xf32>
    %c1_22 = arith.constant 1 : index
    %c0_23 = arith.constant 0 : index
    %28 = vector.load %arg9[%c1_22, %c0_23] : memref<16x256xf32, #tpu.memory_space<vmem>>, vector<8x256xf32>
    %c1_24 = arith.constant 1 : index
    %c0_25 = arith.constant 0 : index
    %c0_26 = arith.constant 0 : index
    %29 = vector.load %arg4[%c1_24, %c0_25, %c0_26] : memref<9x256x256xf32, #tpu.memory_space<vmem>>, vector<1x256x256xf32>
    %30 = vector.shape_cast %29 : vector<1x256x256xf32> to vector<256x256xf32>
    %cst_27 = arith.constant dense<0.000000e+00> : vector<8x256xf32>
    %31 = tpu.matmul %28, %30, %cst_27 {dimension_numbers = #tpu.dot_dimension_numbers<[1], [0], [0], [1], [0, 0, 1, 1], [], []>} : vector<8x256xf32>, vector<256x256xf32>, vector<8x256xf32> -> vector<8x256xf32>
    %32 = arith.addf %27, %31 : vector<8x256xf32>
    %c2_28 = arith.constant 2 : index
    %c0_29 = arith.constant 0 : index
    %33 = vector.load %arg9[%c2_28, %c0_29] : memref<16x256xf32, #tpu.memory_space<vmem>>, vector<8x256xf32>
    %c2_30 = arith.constant 2 : index
    %c0_31 = arith.constant 0 : index
    %c0_32 = arith.constant 0 : index
    %34 = vector.load %arg4[%c2_30, %c0_31, %c0_32] : memref<9x256x256xf32, #tpu.memory_space<vmem>>, vector<1x256x256xf32>
    %35 = vector.shape_cast %34 : vector<1x256x256xf32> to vector<256x256xf32>
    %cst_33 = arith.constant dense<0.000000e+00> : vector<8x256xf32>
    %36 = tpu.matmul %33, %35, %cst_33 {dimension_numbers = #tpu.dot_dimension_numbers<[1], [0], [0], [1], [0, 0, 1, 1], [], []>} : vector<8x256xf32>, vector<256x256xf32>, vector<8x256xf32> -> vector<8x256xf32>
    %37 = arith.addf %32, %36 : vector<8x256xf32>
    %c3_34 = arith.constant 3 : index
    %c0_35 = arith.constant 0 : index
    %38 = vector.load %arg9[%c3_34, %c0_35] : memref<16x256xf32, #tpu.memory_space<vmem>>, vector<8x256xf32>
    %c3_36 = arith.constant 3 : index
    %c0_37 = arith.constant 0 : index
    %c0_38 = arith.constant 0 : index
    %39 = vector.load %arg4[%c3_36, %c0_37, %c0_38] : memref<9x256x256xf32, #tpu.memory_space<vmem>>, vector<1x256x256xf32>
    %40 = vector.shape_cast %39 : vector<1x256x256xf32> to vector<256x256xf32>
    %cst_39 = arith.constant dense<0.000000e+00> : vector<8x256xf32>
    %41 = tpu.matmul %38, %40, %cst_39 {dimension_numbers = #tpu.dot_dimension_numbers<[1], [0], [0], [1], [0, 0, 1, 1], [], []>} : vector<8x256xf32>, vector<256x256xf32>, vector<8x256xf32> -> vector<8x256xf32>
    %42 = arith.addf %37, %41 : vector<8x256xf32>
    %c4_40 = arith.constant 4 : index
    %c0_41 = arith.constant 0 : index
    %43 = vector.load %arg9[%c4_40, %c0_41] : memref<16x256xf32, #tpu.memory_space<vmem>>, vector<8x256xf32>
    %c4_42 = arith.constant 4 : index
    %c0_43 = arith.constant 0 : index
    %c0_44 = arith.constant 0 : index
    %44 = vector.load %arg4[%c4_42, %c0_43, %c0_44] : memref<9x256x256xf32, #tpu.memory_space<vmem>>, vector<1x256x256xf32>
    %45 = vector.shape_cast %44 : vector<1x256x256xf32> to vector<256x256xf32>
    %cst_45 = arith.constant dense<0.000000e+00> : vector<8x256xf32>
    %46 = tpu.matmul %43, %45, %cst_45 {dimension_numbers = #tpu.dot_dimension_numbers<[1], [0], [0], [1], [0, 0, 1, 1], [], []>} : vector<8x256xf32>, vector<256x256xf32>, vector<8x256xf32> -> vector<8x256xf32>
    %47 = arith.addf %42, %46 : vector<8x256xf32>
    %c5 = arith.constant 5 : index
    %c0_46 = arith.constant 0 : index
    %48 = vector.load %arg9[%c5, %c0_46] : memref<16x256xf32, #tpu.memory_space<vmem>>, vector<8x256xf32>
    %c5_47 = arith.constant 5 : index
    %c0_48 = arith.constant 0 : index
    %c0_49 = arith.constant 0 : index
    %49 = vector.load %arg4[%c5_47, %c0_48, %c0_49] : memref<9x256x256xf32, #tpu.memory_space<vmem>>, vector<1x256x256xf32>
    %50 = vector.shape_cast %49 : vector<1x256x256xf32> to vector<256x256xf32>
    %cst_50 = arith.constant dense<0.000000e+00> : vector<8x256xf32>
    %51 = tpu.matmul %48, %50, %cst_50 {dimension_numbers = #tpu.dot_dimension_numbers<[1], [0], [0], [1], [0, 0, 1, 1], [], []>} : vector<8x256xf32>, vector<256x256xf32>, vector<8x256xf32> -> vector<8x256xf32>
    %52 = arith.addf %47, %51 : vector<8x256xf32>
    %c6 = arith.constant 6 : index
    %c0_51 = arith.constant 0 : index
    %53 = vector.load %arg9[%c6, %c0_51] : memref<16x256xf32, #tpu.memory_space<vmem>>, vector<8x256xf32>
    %c6_52 = arith.constant 6 : index
    %c0_53 = arith.constant 0 : index
    %c0_54 = arith.constant 0 : index
    %54 = vector.load %arg4[%c6_52, %c0_53, %c0_54] : memref<9x256x256xf32, #tpu.memory_space<vmem>>, vector<1x256x256xf32>
    %55 = vector.shape_cast %54 : vector<1x256x256xf32> to vector<256x256xf32>
    %cst_55 = arith.constant dense<0.000000e+00> : vector<8x256xf32>
    %56 = tpu.matmul %53, %55, %cst_55 {dimension_numbers = #tpu.dot_dimension_numbers<[1], [0], [0], [1], [0, 0, 1, 1], [], []>} : vector<8x256xf32>, vector<256x256xf32>, vector<8x256xf32> -> vector<8x256xf32>
    %57 = arith.addf %52, %56 : vector<8x256xf32>
    %c7 = arith.constant 7 : index
    %c0_56 = arith.constant 0 : index
    %58 = vector.load %arg9[%c7, %c0_56] : memref<16x256xf32, #tpu.memory_space<vmem>>, vector<8x256xf32>
    %c7_57 = arith.constant 7 : index
    %c0_58 = arith.constant 0 : index
    %c0_59 = arith.constant 0 : index
    %59 = vector.load %arg4[%c7_57, %c0_58, %c0_59] : memref<9x256x256xf32, #tpu.memory_space<vmem>>, vector<1x256x256xf32>
    %60 = vector.shape_cast %59 : vector<1x256x256xf32> to vector<256x256xf32>
    %cst_60 = arith.constant dense<0.000000e+00> : vector<8x256xf32>
    %61 = tpu.matmul %58, %60, %cst_60 {dimension_numbers = #tpu.dot_dimension_numbers<[1], [0], [0], [1], [0, 0, 1, 1], [], []>} : vector<8x256xf32>, vector<256x256xf32>, vector<8x256xf32> -> vector<8x256xf32>
    %62 = arith.addf %57, %61 : vector<8x256xf32>
    %c8 = arith.constant 8 : index
    %c0_61 = arith.constant 0 : index
    %63 = vector.load %arg9[%c8, %c0_61] : memref<16x256xf32, #tpu.memory_space<vmem>>, vector<8x256xf32>
    %c8_62 = arith.constant 8 : index
    %c0_63 = arith.constant 0 : index
    %c0_64 = arith.constant 0 : index
    %64 = vector.load %arg4[%c8_62, %c0_63, %c0_64] : memref<9x256x256xf32, #tpu.memory_space<vmem>>, vector<1x256x256xf32>
    %65 = vector.shape_cast %64 : vector<1x256x256xf32> to vector<256x256xf32>
    %cst_65 = arith.constant dense<0.000000e+00> : vector<8x256xf32>
    %66 = tpu.matmul %63, %65, %cst_65 {dimension_numbers = #tpu.dot_dimension_numbers<[1], [0], [0], [1], [0, 0, 1, 1], [], []>} : vector<8x256xf32>, vector<256x256xf32>, vector<8x256xf32> -> vector<8x256xf32>
    %67 = arith.addf %62, %66 : vector<8x256xf32>
    %c0_66 = arith.constant 0 : index
    %c0_67 = arith.constant 0 : index
    %c0_68 = arith.constant 0 : index
    %68 = vector.load %arg2[%c0_66, %c0_67, %c0_68] : memref<1x8x256xf32, #tpu.memory_space<vmem>>, vector<1x8x256xf32>
    %69 = vector.shape_cast %68 : vector<1x8x256xf32> to vector<8x256xf32>
    %c0_69 = arith.constant 0 : index
    %c0_70 = arith.constant 0 : index
    %70 = vector.load %arg5[%c0_69, %c0_70] : memref<256x256xf32, #tpu.memory_space<vmem>>, vector<256x256xf32>
    %cst_71 = arith.constant dense<0.000000e+00> : vector<8x256xf32>
    %71 = tpu.matmul %69, %70, %cst_71 {dimension_numbers = #tpu.dot_dimension_numbers<[1], [0], [0], [1], [0, 0, 1, 1], [], []>} : vector<8x256xf32>, vector<256x256xf32>, vector<8x256xf32> -> vector<8x256xf32>
    %c0_72 = arith.constant 0 : index
    %c0_73 = arith.constant 0 : index
    %72 = vector.load %arg7[%c0_72, %c0_73] : memref<2x256xf32, #tpu.memory_space<vmem>>, vector<1x256xf32>
    %73 = vector.broadcast %72 : vector<1x256xf32> to vector<8x256xf32>
    %74 = arith.mulf %67, %73 : vector<8x256xf32>
    %75 = arith.addf %74, %71 : vector<8x256xf32>
    %c1_74 = arith.constant 1 : index
    %c0_75 = arith.constant 0 : index
    %76 = vector.load %arg7[%c1_74, %c0_75] : memref<2x256xf32, #tpu.memory_space<vmem>>, vector<1x256xf32>
    %77 = vector.broadcast %76 : vector<1x256xf32> to vector<8x256xf32>
    %78 = arith.addf %75, %77 : vector<8x256xf32>
    %cst_76 = arith.constant 0.000000e+00 : f32
    %79 = vector.broadcast %cst_76 : f32 to vector<8x256xf32>
    %80 = arith.maximumf %78, %79 : vector<8x256xf32>
    %c0_77 = arith.constant 0 : index
    %c0_78 = arith.constant 0 : index
    %c0_79 = arith.constant 0 : index
    %81 = vector.load %arg8[%c0_77, %c0_78, %c0_79] : memref<1x8x256xf32, #tpu.memory_space<vmem>>, vector<1x8x256xf32>
    %82 = vector.shape_cast %81 : vector<1x8x256xf32> to vector<8x256xf32>
    %83 = vector.shape_cast %80 : vector<8x256xf32> to vector<1x8x256xf32>
    tpu.vector_store %arg8[%c0_77, %c0_78, %c0_79], %83 {strides = array<i32>} : memref<1x8x256xf32, #tpu.memory_space<vmem>>, vector<1x8x256xf32>,
    return
  }
  func.func @transform_0(%arg0: i32) -> (i32, i32, i32) {
    %c0_i32 = arith.constant 0 : i32
    %c0_i32_0 = arith.constant 0 : i32
    %c0_i32_1 = arith.constant 0 : i32
    return %arg0, %c0_i32, %c0_i32_0 : i32, i32, i32
  }
  func.func @transform_1(%arg0: i32) -> (i32, i32, i32) {
    %c0_i32 = arith.constant 0 : i32
    %c0_i32_0 = arith.constant 0 : i32
    %c0_i32_1 = arith.constant 0 : i32
    return %arg0, %c0_i32, %c0_i32_0 : i32, i32, i32
  }
  func.func @transform_2(%arg0: i32) -> (i32, i32) {
    %c0_i32 = arith.constant 0 : i32
    %c0_i32_0 = arith.constant 0 : i32
    %c0_i32_1 = arith.constant 0 : i32
    return %c0_i32, %c0_i32_0 : i32, i32
  }
  func.func @transform_3(%arg0: i32) -> (i32, i32, i32) {
    %c0_i32 = arith.constant 0 : i32
    %c0_i32_0 = arith.constant 0 : i32
    %c0_i32_1 = arith.constant 0 : i32
    %c0_i32_2 = arith.constant 0 : i32
    return %c0_i32, %c0_i32_0, %c0_i32_1 : i32, i32, i32
  }
  func.func @transform_4(%arg0: i32) -> (i32, i32) {
    %c0_i32 = arith.constant 0 : i32
    %c0_i32_0 = arith.constant 0 : i32
    %c0_i32_1 = arith.constant 0 : i32
    return %c0_i32, %c0_i32_0 : i32, i32
  }
  func.func @transform_5(%arg0: i32) -> (i32, i32) {
    %c0_i32 = arith.constant 0 : i32
    %c0_i32_0 = arith.constant 0 : i32
    %c0_i32_1 = arith.constant 0 : i32
    return %c0_i32, %c0_i32_0 : i32, i32
  }
  func.func @transform_6(%arg0: i32) -> (i32, i32) {
    %c0_i32 = arith.constant 0 : i32
    %c0_i32_0 = arith.constant 0 : i32
    %c0_i32_1 = arith.constant 0 : i32
    return %c0_i32, %c0_i32_0 : i32, i32
  }
  func.func @transform_7(%arg0: i32) -> (i32, i32, i32) {
    %c0_i32 = arith.constant 0 : i32
    %c0_i32_0 = arith.constant 0 : i32
    %c0_i32_1 = arith.constant 0 : i32
    return %arg0, %c0_i32, %c0_i32_0 : i32, i32, i32
  }
}

</mosaic_0001>

<llo_original>
// kernel: tile.46
$region0: #{tile.46}
  %s0 = inlined_call_operand.vmem [shape: f32[16,16], index: 0, kind: input, shape index: {}]
  %s1 = inlined_call_operand.vmem [shape: f32[1,256], index: 1, kind: output, shape index: {}]
  $region1: #{tile.46} parent=0
    #allocation0 [shape = 'u8[8192]{0}', space=vmem, size = 0x2000, scoped, tag = 'scoped mem for output reshape']
    %s2 = smov 3
    %v3 = vld [vmem:[%s0] ss:$8 sm:%s2]
    %vm4 = vcmask 130048
    %5 = vst.msk [vmem:[#allocation0] ss:$8 sm:$0x3] %vm4, %v3
    %s6 = scalar_lea.vmem %s0, 7
    %s7 = smov 3
    %v8 = vld [vmem:[%s6] ss:$8 sm:%s7]
    %9 = vrot.lane.b32.xlu0 %v8, 112
    %v10 = vpop.permute.xlu0 %9
    %vm11 = vcmask 1048448
    %12 = vst.msk [vmem:[#allocation0] ss:$8 sm:$0x3] %vm11, %v10
    %s13 = scalar_lea.vmem %s0, 6
    %s14 = smov 3
    %v15 = vld [vmem:[%s13] ss:$8 sm:%s14]
    %16 = vrot.lane.b32.xlu0 %v15, 96
    %v17 = vpop.permute.xlu0 %16
    %vm18 = vcmask 917248
    %19 = vst.msk [vmem:[#allocation0] ss:$8 sm:$0x3] %vm18, %v17
    %s20 = scalar_lea.vmem %s0, 5
    %s21 = smov 3
    %v22 = vld [vmem:[%s20] ss:$8 sm:%s21]
    %23 = vrot.lane.b32.xlu0 %v22, 80
    %v24 = vpop.permute.xlu0 %23
    %vm25 = vcmask 786048
    %26 = vst.msk [vmem:[#allocation0] ss:$8 sm:$0x3] %vm25, %v24
    %s27 = scalar_lea.vmem %s0, 4
    %s28 = smov 3
    %v29 = vld [vmem:[%s27] ss:$8 sm:%s28]
    %30 = vrot.lane.b32.xlu0 %v29, 64
    %v31 = vpop.permute.xlu0 %30
    %vm32 = vcmask 654848
    %33 = vst.msk [vmem:[#allocation0] ss:$8 sm:$0x3] %vm32, %v31
    %s34 = scalar_lea.vmem %s0, 3
    %s35 = smov 3
    %v36 = vld [vmem:[%s34] ss:$8 sm:%s35]
    %37 = vrot.lane.b32.xlu0 %v36, 48
    %v38 = vpop.permute.xlu0 %37
    %vm39 = vcmask 523648
    %40 = vst.msk [vmem:[#allocation0] ss:$8 sm:$0x3] %vm39, %v38
    %s41 = scalar_lea.vmem %s0, 2
    %s42 = smov 3
    %v43 = vld [vmem:[%s41] ss:$8 sm:%s42]
    %44 = vrot.lane.b32.xlu0 %v43, 32
    %v45 = vpop.permute.xlu0 %44
    %vm46 = vcmask 392448
    %47 = vst.msk [vmem:[#allocation0] ss:$8 sm:$0x3] %vm46, %v45
    %s48 = scalar_lea.vmem %s0, 1
    %s49 = smov 3
    %v50 = vld [vmem:[%s48] ss:$8 sm:%s49]
    %51 = vrot.lane.b32.xlu0 %v50, 16
    %v52 = vpop.permute.xlu0 %51
    %vm53 = vcmask 261248
    %54 = vst.msk [vmem:[#allocation0] ss:$8 sm:$0x3] %vm53, %v52
    %s56 = sshll.u32 1, 1
    %s57 = ssub.s32 %s56, 1
    %v59 = vld [vmem:[#allocation0] sm:%s57]
    %s60 = sshll.u32 1, 1
    %s61 = ssub.s32 %s60, 1
    %62 = vst [vmem:[%s1] sm:%s61] %v59
    %s63 = scalar_lea.vmem [#allocation0], 8
    %v64 = vld [vmem:[%s63] sm:%s57]
    %s65 = sshll.u32 1, 1
    %s66 = ssub.s32 %s65, 1
    %s67 = scalar_lea.vmem %s1, 1
    %68 = vst [vmem:[%s67] sm:%s66] %v64

// kernel: tile.33
$region0: #{tile.33}
  #allocation0 [shape = 's32[1]{0}', space=sflag, size = 0x4, scoped, tag = 'scoped memory for tile.33']
  %s0 = inlined_call_operand.vmem [shape: f32[16], index: 0, kind: input, shape index: {}]
  %s1 = inlined_call_operand.vmem [shape: f32[16,16], index: 1, kind: output, shape index: {}]
  // Predicated region
  $region2: #{tile.33} parent=0 // pred_check
    _
  $region3: #{tile.33} parent=0 // pred_check_branch
    %3 = sbr.rel (0) target = $region5
  $region4: #{tile.33} parent=0 // pred_region
    _
  $region5: #{tile.33} parent=0 // pred_fallthru
    _
  %v4 = vld [vmem:[%s0] ss:$0 sm:$0xff]
  %5 = vst [vmem:[%s1] sm:$0xff] %v4
  %s6 = scalar_lea.vmem %s1, 8
  %7 = vst [vmem:[%s6] sm:$0xff] %v4

// kernel: stgcn_block_forward.1
$region0: #{stgcn_block_forward.1}
  #allocation0 [shape = 'u32[]', space=smem, size = 0x4, offset = 0x4, fixed_abs, tag = 'smem constant byte address 0x4 - core index']
  #allocation1 [shape = 'u32[144,128]{1,0:T(1,128)}', space=vmem, size = 0x12000, scoped, tag = 'internal scratch']
  #allocation2 [shape = 'f32[16,256]{1,0:T(8,128)}', space=vmem, size = 0x4000, scoped, tag = 'scratch operand']
  %s0 = inlined_call_operand.vmem [shape: f32[2,8,256], index: 0, kind: input, shape index: {}]
  %s1 = inlined_call_operand.vmem [shape: f32[2,8,256], index: 1, kind: input, shape index: {}]
  %s2 = inlined_call_operand.vmem [shape: f32[256,256], index: 2, kind: input, shape index: {}]
  %s3 = inlined_call_operand.vmem [shape: f32[9,256,256], index: 3, kind: input, shape index: {}]
  %s4 = inlined_call_operand.vmem [shape: f32[256,256], index: 4, kind: input, shape index: {}]
  %s5 = inlined_call_operand.vmem [shape: f32[4,256], index: 5, kind: input, shape index: {}]
  %s6 = inlined_call_operand.vmem [shape: f32[2,256], index: 6, kind: input, shape index: {}]
  %s7 = inlined_call_operand.vmem [shape: f32[2,8,256], index: 7, kind: output, shape index: {}]
  %s8 = sld [smem:[#allocation0]]
  $region61: #{stgcn_block_forward.1} parent=0
    _
  %s10 = ssub.s32 1, %s8
  %s11 = scalar_select 0, %s10, %s8
  loop: start=0, step=1, limit=4
  $region2: #{stgcn_block_forward.1} parent=0 // loop_pre_header
    _
  $region3: #{stgcn_block_forward.1} parent=0 // loop_header
    %s13 = sphi 0, %s17
    %p14 = scmp.ge.s32.totalorder %s13, 4
    %s23 = sphi 0, %s25
    %s26 = sphi 0, %s23
    %s27 = sphi 0, %s26
    %s43 = sphi 0, %s27
    %s49 = sphi 0, %s51
    %s52 = sphi 0, %s49
    %s53 = sphi 0, %s52
    %s69 = sphi 0, %s53
    %s73 = sphi 0, %s73
    %s75 = sphi 0, %s73
    %s76 = sphi 0, %s75
    %s90 = sphi 0, %s76
    %s94 = sphi 0, %s94
    %s96 = sphi 0, %s94
    %s97 = sphi 0, %s96
    %s111 = sphi 0, %s97
    %s115 = sphi 0, %s115
    %s117 = sphi 0, %s115
    %s118 = sphi 0, %s117
    %s132 = sphi 0, %s118
    %s136 = sphi 0, %s136
    %s138 = sphi 0, %s136
    %s139 = sphi 0, %s138
    %s153 = sphi 0, %s139
    %s157 = sphi 0, %s157
    %s159 = sphi 0, %s157
    %s160 = sphi 0, %s159
    %s174 = sphi 0, %s160
    %s180 = sphi 0, %s182
    %s183 = sphi 0, %s180
    %s184 = sphi 0, %s183
    %s200 = sphi 0, %s184
  $region4: #{stgcn_block_forward.1} parent=0 // loop_header_branch
    %16 = sbr.rel (%p14) target = $region8
  $region5: #{stgcn_block_forward.1} parent=0 // loop_body
    %s18 = ssub.s32 %s13, 1
    %s19 = ssub.s32 %s13, 2
    %s20 = sadd.s32 %s13, 1
    %s21 = ssub.s32 %s13, %s20
    %p22 = scmp.eq.s32.totalorder %s21, 0
    %s24 = sadd.s32 %s23, 1
    %s25 = scalar_select %p22, %s23, %s24
    %p28 = pneg %p22
    %p29 = scmp.eq.s32.totalorder %s13, 1
    %p30 = por %p28, %p29
    %p31 = scmp.ne.s32.totalorder %s23, %s26
    %p32 = scmp.eq.s32.totalorder %s13, 0
    %p33 = por %p31, %p32
    %p34 = scmp.ne.s32.totalorder %s23, %s26
    %p35 = scmp.eq.s32.totalorder %s18, 1
    %p36 = por %p34, %p35
    %p37 = scmp.ne.s32.totalorder %s26, %s27
    %p38 = scmp.eq.s32.totalorder %s18, 0
    %p39 = por %p37, %p38
    %p40 = scmp.ne.s32.totalorder %s26, %s27
    %p41 = scmp.eq.s32.totalorder %s19, 1
    %p42 = por %p40, %p41
    %p44 = scmp.ne.s32.totalorder %s27, %s43
    %p45 = scmp.eq.s32.totalorder %s19, 0
    %p46 = por %p44, %p45
    %s47 = ssub.s32 %s13, %s20
    %p48 = scmp.eq.s32.totalorder %s47, 0
    %s50 = sadd.s32 %s49, 1
    %s51 = scalar_select %p48, %s49, %s50
    %p54 = pneg %p48
    %p55 = scmp.eq.s32.totalorder %s13, 1
    %p56 = por %p54, %p55
    %p57 = scmp.ne.s32.totalorder %s49, %s52
    %p58 = scmp.eq.s32.totalorder %s13, 0
    %p59 = por %p57, %p58
    %p60 = scmp.ne.s32.totalorder %s49, %s52
    %p61 = scmp.eq.s32.totalorder %s18, 1
    %p62 = por %p60, %p61
    %p63 = scmp.ne.s32.totalorder %s52, %s53
    %p64 = scmp.eq.s32.totalorder %s18, 0
    %p65 = por %p63, %p64
    %p66 = scmp.ne.s32.totalorder %s52, %s53
    %p67 = scmp.eq.s32.totalorder %s19, 1
    %p68 = por %p66, %p67
    %p70 = scmp.ne.s32.totalorder %s53, %s69
    %p71 = scmp.eq.s32.totalorder %s19, 0
    %p72 = por %p70, %p71
    %s74 = sadd.s32 %s73, 1
    %p77 = scmp.eq.s32.totalorder %s13, 1
    %p78 = scmp.ne.s32.totalorder %s73, %s75
    %p79 = scmp.eq.s32.totalorder %s13, 0
    %p80 = por %p78, %p79
    %p81 = scmp.ne.s32.totalorder %s73, %s75
    %p82 = scmp.eq.s32.totalorder %s18, 1
    %p83 = por %p81, %p82
    %p84 = scmp.ne.s32.totalorder %s75, %s76
    %p85 = scmp.eq.s32.totalorder %s18, 0
    %p86 = por %p84, %p85
    %p87 = scmp.ne.s32.totalorder %s75, %s76
    %p88 = scmp.eq.s32.totalorder %s19, 1
    %p89 = por %p87, %p88
    %p91 = scmp.ne.s32.totalorder %s76, %s90
    %p92 = scmp.eq.s32.totalorder %s19, 0
    %p93 = por %p91, %p92
    %s95 = sadd.s32 %s94, 1
    %p98 = scmp.eq.s32.totalorder %s13, 1
    %p99 = scmp.ne.s32.totalorder %s94, %s96
    %p100 = scmp.eq.s32.totalorder %s13, 0
    %p101 = por %p99, %p100
    %p102 = scmp.ne.s32.totalorder %s94, %s96
    %p103 = scmp.eq.s32.totalorder %s18, 1
    %p104 = por %p102, %p103
    %p105 = scmp.ne.s32.totalorder %s96, %s97
    %p106 = scmp.eq.s32.totalorder %s18, 0
    %p107 = por %p105, %p106
    %p108 = scmp.ne.s32.totalorder %s96, %s97
    %p109 = scmp.eq.s32.totalorder %s19, 1
    %p110 = por %p108, %p109
    %p112 = scmp.ne.s32.totalorder %s97, %s111
    %p113 = scmp.eq.s32.totalorder %s19, 0
    %p114 = por %p112, %p113
    %s116 = sadd.s32 %s115, 1
    %p119 = scmp.eq.s32.totalorder %s13, 1
    %p120 = scmp.ne.s32.totalorder %s115, %s117
    %p121 = scmp.eq.s32.totalorder %s13, 0
    %p122 = por %p120, %p121
    %p123 = scmp.ne.s32.totalorder %s115, %s117
    %p124 = scmp.eq.s32.totalorder %s18, 1
    %p125 = por %p123, %p124
    %p126 = scmp.ne.s32.totalorder %s117, %s118
    %p127 = scmp.eq.s32.totalorder %s18, 0
    %p128 = por %p126, %p127
    %p129 = scmp.ne.s32.totalorder %s117, %s118
    %p130 = scmp.eq.s32.totalorder %s19, 1
    %p131 = por %p129, %p130
    %p133 = scmp.ne.s32.totalorder %s118, %s132
    %p134 = scmp.eq.s32.totalorder %s19, 0
    %p135 = por %p133, %p134
    %s137 = sadd.s32 %s136, 1
    %p140 = scmp.eq.s32.totalorder %s13, 1
    %p141 = scmp.ne.s32.totalorder %s136, %s138
    %p142 = scmp.eq.s32.totalorder %s13, 0
    %p143 = por %p141, %p142
    %p144 = scmp.ne.s32.totalorder %s136, %s138
    %p145 = scmp.eq.s32.totalorder %s18, 1
    %p146 = por %p144, %p145
    %p147 = scmp.ne.s32.totalorder %s138, %s139
    %p148 = scmp.eq.s32.totalorder %s18, 0
    %p149 = por %p147, %p148
    %p150 = scmp.ne.s32.totalorder %s138, %s139
    %p151 = scmp.eq.s32.totalorder %s19, 1
    %p152 = por %p150, %p151
    %p154 = scmp.ne.s32.totalorder %s139, %s153
    %p155 = scmp.eq.s32.totalorder %s19, 0
    %p156 = por %p154, %p155
    %s158 = sadd.s32 %s157, 1
    %p161 = scmp.eq.s32.totalorder %s13, 1
    %p162 = scmp.ne.s32.totalorder %s157, %s159
    %p163 = scmp.eq.s32.totalorder %s13, 0
    %p164 = por %p162, %p163
    %p165 = scmp.ne.s32.totalorder %s157, %s159
    %p166 = scmp.eq.s32.totalorder %s18, 1
    %p167 = por %p165, %p166
    %p168 = scmp.ne.s32.totalorder %s159, %s160
    %p169 = scmp.eq.s32.totalorder %s18, 0
    %p170 = por %p168, %p169
    %p171 = scmp.ne.s32.totalorder %s159, %s160
    %p172 = scmp.eq.s32.totalorder %s19, 1
    %p173 = por %p171, %p172
    %p175 = scmp.ne.s32.totalorder %s160, %s174
    %p176 = scmp.eq.s32.totalorder %s19, 0
    %p177 = por %p175, %p176
    %s178 = ssub.s32 %s13, %s20
    %p179 = scmp.eq.s32.totalorder %s178, 0
    %s181 = sadd.s32 %s180, 1
    %s182 = scalar_select %p179, %s180, %s181
    %p185 = pneg %p179
    %p186 = scmp.eq.s32.totalorder %s13, 1
    %p187 = por %p185, %p186
    %p188 = scmp.ne.s32.totalorder %s180, %s183
    %p189 = scmp.eq.s32.totalorder %s13, 0
    %p190 = por %p188, %p189
    %p191 = scmp.ne.s32.totalorder %s180, %s183
    %p192 = scmp.eq.s32.totalorder %s18, 1
    %p193 = por %p191, %p192
    %p194 = scmp.ne.s32.totalorder %s183, %s184
    %p195 = scmp.eq.s32.totalorder %s18, 0
    %p196 = por %p194, %p195
    %p197 = scmp.ne.s32.totalorder %s183, %s184
    %p198 = scmp.eq.s32.totalorder %s19, 1
    %p199 = por %p197, %p198
    %p201 = scmp.ne.s32.totalorder %s184, %s200
    %p202 = scmp.eq.s32.totalorder %s19, 0
    %p203 = por %p201, %p202
    %p204 = scmp.le.s32.totalorder 1, %s13
    %p205 = scmp.lt.s32.totalorder %s13, 3
    %p206 = pnand %p204, %p205
    %p207 = pneg %p206
    // Predicated region
    $region9: #{stgcn_block_forward.1} parent=5 // pred_check
      _
    $region10: #{stgcn_block_forward.1} parent=5 // pred_check_branch
      %209 = sbr.rel (%p206) target = $region12
    $region11: #{stgcn_block_forward.1} parent=5 // pred_region
      %s210 = ssub.s32 %s13, 1
      // Predicated region
      $region13: #{stgcn_block_forward.1} parent=11 // pred_check
        %p211 = pneg %p86
      $region14: #{stgcn_block_forward.1} parent=11 // pred_check_branch
        %213 = sbr.rel (%p211) target = $region16
      $region15: #{stgcn_block_forward.1} parent=11 // pred_region
        _
      $region16: #{stgcn_block_forward.1} parent=11 // pred_fallthru
        _
      // Predicated region
      $region17: #{stgcn_block_forward.1} parent=11 // pred_check
        %p214 = pneg %p107
      $region18: #{stgcn_block_forward.1} parent=11 // pred_check_branch
        %216 = sbr.rel (%p214) target = $region20
      $region19: #{stgcn_block_forward.1} parent=11 // pred_region
        _
      $region20: #{stgcn_block_forward.1} parent=11 // pred_fallthru
        _
      // Predicated region
      $region21: #{stgcn_block_forward.1} parent=11 // pred_check
        %p217 = pneg %p128
      $region22: #{stgcn_block_forward.1} parent=11 // pred_check_branch
        %219 = sbr.rel (%p217) target = $region24
      $region23: #{stgcn_block_forward.1} parent=11 // pred_region
        _
      $region24: #{stgcn_block_forward.1} parent=11 // pred_fallthru
        _
      // Predicated region
      $region25: #{stgcn_block_forward.1} parent=11 // pred_check
        %p220 = pneg %p149
      $region26: #{stgcn_block_forward.1} parent=11 // pred_check_branch
        %222 = sbr.rel (%p220) target = $region28
      $region27: #{stgcn_block_forward.1} parent=11 // pred_region
        _
      $region28: #{stgcn_block_forward.1} parent=11 // pred_fallthru
        _
      // Predicated region
      $region29: #{stgcn_block_forward.1} parent=11 // pred_check
        %p223 = pneg %p170
      $region30: #{stgcn_block_forward.1} parent=11 // pred_check_branch
        %225 = sbr.rel (%p223) target = $region32
      $region31: #{stgcn_block_forward.1} parent=11 // pred_region
        _
      $region32: #{stgcn_block_forward.1} parent=11 // pred_fallthru
        _
    $region12: #{stgcn_block_forward.1} parent=5 // pred_fallthru
      _
    %p226 = scmp.lt.s32.totalorder %s13, 2
    // Predicated region
    $region33: #{stgcn_block_forward.1} parent=5 // pred_check
      %p227 = pneg %p226
    $region34: #{stgcn_block_forward.1} parent=5 // pred_check_branch
      %229 = sbr.rel (%p227) target = $region36
    $region35: #{stgcn_block_forward.1} parent=5 // pred_region
      // Predicated region
      $region37: #{stgcn_block_forward.1} parent=35 // pred_check
        %p230 = pneg %p33
      $region38: #{stgcn_block_forward.1} parent=35 // pred_check_branch
        %232 = sbr.rel (%p230) target = $region40
      $region39: #{stgcn_block_forward.1} parent=35 // pred_region
        %p233 = scmp.lt.s32.totalorder %s13, 1
        %s234 = scalar_select %p233, %s13, 1
        %s235 = smul.addr %s234, 2
        %s236 = smul.addr %s235, 8
        %s237 = scalar_lea.vmem %s0, %s236
      $region40: #{stgcn_block_forward.1} parent=35 // pred_fallthru
        _
      // Predicated region
      $region41: #{stgcn_block_forward.1} parent=35 // pred_check
        %p238 = pneg %p59
      $region42: #{stgcn_block_forward.1} parent=35 // pred_check_branch
        %240 = sbr.rel (%p238) target = $region44
      $region43: #{stgcn_block_forward.1} parent=35 // pred_region
        %p241 = scmp.lt.s32.totalorder %s13, 1
        %s242 = scalar_select %p241, %s13, 1
        %s243 = smul.addr %s242, 2
        %s244 = smul.addr %s243, 8
        %s245 = scalar_lea.vmem %s1, %s244
      $region44: #{stgcn_block_forward.1} parent=35 // pred_fallthru
        _
    $region36: #{stgcn_block_forward.1} parent=5 // pred_fallthru
      _
    %p246 = scmp.le.s32.totalorder 1, %s13
    %p247 = scmp.lt.s32.totalorder %s13, 3
    %p248 = pnand %p246, %p247
    %p249 = pneg %p248
    // Predicated region
    $region45: #{stgcn_block_forward.1} parent=5 // pred_check
      _
    $region46: #{stgcn_block_forward.1} parent=5 // pred_check_branch
      %251 = sbr.rel (%p248) target = $region48
    $region47: #{stgcn_block_forward.1} parent=5 // pred_region
      %s252 = ssub.s32 %s13, 1
      %p253 = scmp.lt.s32.totalorder %s18, 1
      %s254 = scalar_select %p253, %s18, 1
      %s255 = smul.addr %s254, 2
      %s256 = smul.addr %s255, 8
      %s257 = scalar_lea.vmem %s0, %s256
      %p258 = pneg %p39
      %p259 = pneg %p36
      %p260 = scmp.lt.s32.totalorder %s18, 1
      %s261 = scalar_select %p260, %s18, 1
      %s262 = smul.addr %s261, 2
      %s263 = smul.addr %s262, 8
      %s264 = scalar_lea.vmem %s1, %s263
      %p265 = pneg %p65
      %p266 = pneg %p62
      %p267 = pneg %p86
      %p268 = pneg %p83
      %p269 = pneg %p107
      %p270 = pneg %p104
      %p271 = pneg %p128
      %p272 = pneg %p125
      %p273 = pneg %p149
      %p274 = pneg %p146
      %p275 = pneg %p170
      %p276 = pneg %p167
      %p277 = pneg %p196
      %p278 = pneg %p193
      %p279 = scmp.lt.s32.totalorder %s18, 1
      %s280 = scalar_select %p279, %s18, 1
      %s281 = smul.addr %s280, 2
      %s282 = smul.addr %s281, 8
      %s283 = scalar_lea.vmem %s7, %s282
      %p284 = scmp.lt.s32.totalorder %s18, 1
      %s285 = scalar_select %p284, %s18, 1
      %s286 = smul.addr %s285, 2
      %s287 = smul.addr %s286, 8
      %s288 = scalar_lea.vmem %s0, %s287
      %p289 = scmp.lt.s32.totalorder %s18, 1
      %s290 = scalar_select %p289, %s18, 1
      %s291 = smul.addr %s290, 2
      %s292 = smul.addr %s291, 8
      %s293 = scalar_lea.vmem %s1, %s292
      %p294 = scmp.lt.s32.totalorder %s18, 1
      %s295 = scalar_select %p294, %s18, 1
      %s296 = smul.addr %s295, 2
      %s297 = smul.addr %s296, 8
      %s298 = scalar_lea.vmem %s7, %s297
      %v299 = vld [vmem:[%s288] sm:$0xff]
      %v300 = vld [vmem:[%s288 + $0x8] sm:$0xff]
      %v301 = vld [vmem:[%s2] sm:$0xff]
      %v302 = vld [vmem:[%s2 + $0x8] sm:$0xff]
      %v303 = vld [vmem:[%s2 + $0x10] sm:$0xff]
      %v304 = vld [vmem:[%s2 + $0x18] sm:$0xff]
      %v305 = vld [vmem:[%s2 + $0x20] sm:$0xff]
      %v306 = vld [vmem:[%s2 + $0x28] sm:$0xff]
      %v307 = vld [vmem:[%s2 + $0x30] sm:$0xff]
      %v308 = vld [vmem:[%s2 + $0x38] sm:$0xff]
      %v309 = vld [vmem:[%s2 + $0x40] sm:$0xff]
      %v310 = vld [vmem:[%s2 + $0x48] sm:$0xff]
      %v311 = vld [vmem:[%s2 + $0x50] sm:$0xff]
      %v312 = vld [vmem:[%s2 + $0x58] sm:$0xff]
      %v313 = vld [vmem:[%s2 + $0x60] sm:$0xff]
      %v314 = vld [vmem:[%s2 + $0x68] sm:$0xff]
      %v315 = vld [vmem:[%s2 + $0x70] sm:$0xff]
      %v316 = vld [vmem:[%s2 + $0x78] sm:$0xff]
      %v317 = vld [vmem:[%s2 + $0x80] sm:$0xff]
      %v318 = vld [vmem:[%s2 + $0x88] sm:$0xff]
      %v319 = vld [vmem:[%s2 + $0x90] sm:$0xff]
      %v320 = vld [vmem:[%s2 + $0x98] sm:$0xff]
      %v321 = vld [vmem:[%s2 + $0xa0] sm:$0xff]
      %v322 = vld [vmem:[%s2 + $0xa8] sm:$0xff]
      %v323 = vld [vmem:[%s2 + $0xb0] sm:$0xff]
      %v324 = vld [vmem:[%s2 + $0xb8] sm:$0xff]
      %v325 = vld [vmem:[%s2 + $0xc0] sm:$0xff]
      %v326 = vld [vmem:[%s2 + $0xc8] sm:$0xff]
      %v327 = vld [vmem:[%s2 + $0xd0] sm:$0xff]
      %v328 = vld [vmem:[%s2 + $0xd8] sm:$0xff]
      %v329 = vld [vmem:[%s2 + $0xe0] sm:$0xff]
      %v330 = vld [vmem:[%s2 + $0xe8] sm:$0xff]
      %v331 = vld [vmem:[%s2 + $0xf0] sm:$0xff]
      %v332 = vld [vmem:[%s2 + $0xf8] sm:$0xff]
      %v333 = vld [vmem:[%s2 + $0x100] sm:$0xff]
      %v334 = vld [vmem:[%s2 + $0x108] sm:$0xff]
      %v335 = vld [vmem:[%s2 + $0x110] sm:$0xff]
      %v336 = vld [vmem:[%s2 + $0x118] sm:$0xff]
      %v337 = vld [vmem:[%s2 + $0x120] sm:$0xff]
      %v338 = vld [vmem:[%s2 + $0x128] sm:$0xff]
      %v339 = vld [vmem:[%s2 + $0x130] sm:$0xff]
      %v340 = vld [vmem:[%s2 + $0x138] sm:$0xff]
      %v341 = vld [vmem:[%s2 + $0x140] sm:$0xff]
      %v342 = vld [vmem:[%s2 + $0x148] sm:$0xff]
      %v343 = vld [vmem:[%s2 + $0x150] sm:$0xff]
      %v344 = vld [vmem:[%s2 + $0x158] sm:$0xff]
      %v345 = vld [vmem:[%s2 + $0x160] sm:$0xff]
      %v346 = vld [vmem:[%s2 + $0x168] sm:$0xff]
      %v347 = vld [vmem:[%s2 + $0x170] sm:$0xff]
      %v348 = vld [vmem:[%s2 + $0x178] sm:$0xff]
      %v349 = vld [vmem:[%s2 + $0x180] sm:$0xff]
      %v350 = vld [vmem:[%s2 + $0x188] sm:$0xff]
      %v351 = vld [vmem:[%s2 + $0x190] sm:$0xff]
      %v352 = vld [vmem:[%s2 + $0x198] sm:$0xff]
      %v353 = vld [vmem:[%s2 + $0x1a0] sm:$0xff]
      %v354 = vld [vmem:[%s2 + $0x1a8] sm:$0xff]
      %v355 = vld [vmem:[%s2 + $0x1b0] sm:$0xff]
      %v356 = vld [vmem:[%s2 + $0x1b8] sm:$0xff]
      %v357 = vld [vmem:[%s2 + $0x1c0] sm:$0xff]
      %v358 = vld [vmem:[%s2 + $0x1c8] sm:$0xff]
      %v359 = vld [vmem:[%s2 + $0x1d0] sm:$0xff]
      %v360 = vld [vmem:[%s2 + $0x1d8] sm:$0xff]
      %v361 = vld [vmem:[%s2 + $0x1e0] sm:$0xff]
      %v362 = vld [vmem:[%s2 + $0x1e8] sm:$0xff]
      %v363 = vld [vmem:[%s2 + $0x1f0] sm:$0xff]
      %v364 = vld [vmem:[%s2 + $0x1f8] sm:$0xff]
      %365 = vmatprep.subr.mxu0 %v332
      %366 = vmatpush1.msra.mxu0 %v331
      %367 = vmatprep.subr.mxu0 %v330
      %368 = vmatpush1.msra.mxu0 %v329
      %369 = vmatprep.subr.mxu0 %v328
      %370 = vmatpush1.msra.mxu0 %v327
      %371 = vmatprep.subr.mxu0 %v326
      %372 = vmatpush1.msra.mxu0 %v325
      %373 = vmatprep.subr.mxu0 %v324
      %374 = vmatpush1.msra.mxu0 %v323
      %375 = vmatprep.subr.mxu0 %v322
      %376 = vmatpush1.msra.mxu0 %v321
      %377 = vmatprep.subr.mxu0 %v320
      %378 = vmatpush1.msra.mxu0 %v319
      %379 = vmatprep.subr.mxu0 %v318
      %380 = vmatpush1.msra.mxu0 %v317
      %381 = vmatprep.subr.mxu0 %v316
      %382 = vmatpush1.msra.mxu0 %v315
      %383 = vmatprep.subr.mxu0 %v314
      %384 = vmatpush1.msra.mxu0 %v313
      %385 = vmatprep.subr.mxu0 %v312
      %386 = vmatpush1.msra.mxu0 %v311
      %387 = vmatprep.subr.mxu0 %v310
      %388 = vmatpush1.msra.mxu0 %v309
      %389 = vmatprep.subr.mxu0 %v308
      %390 = vmatpush1.msra.mxu0 %v307
      %391 = vmatprep.subr.mxu0 %v306
      %392 = vmatpush1.msra.mxu0 %v305
      %393 = vmatprep.subr.mxu0 %v304
      %394 = vmatpush1.msra.mxu0 %v303
      %395 = vmatprep.subr.mxu0 %v302
      %396 = vmatpush1.msra.mxu0 %v301
      %397 = vmatprep.subr.mxu0 %v364
      %398 = vmatpush2.msra.mxu0 %v363
      %399 = vmatprep.subr.mxu0 %v362
      %400 = vmatpush2.msra.mxu0 %v361
      %401 = vmatprep.subr.mxu0 %v360
      %402 = vmatpush2.msra.mxu0 %v359
      %403 = vmatprep.subr.mxu0 %v358
      %404 = vmatpush2.msra.mxu0 %v357
      %405 = vmatprep.subr.mxu0 %v356
      %406 = vmatpush2.msra.mxu0 %v355
      %407 = vmatprep.subr.mxu0 %v354
      %408 = vmatpush2.msra.mxu0 %v353
      %409 = vmatprep.subr.mxu0 %v352
      %410 = vmatpush2.msra.mxu0 %v351
      %411 = vmatprep.subr.mxu0 %v350
      %412 = vmatpush2.msra.mxu0 %v349
      %413 = vmatprep.subr.mxu0 %v348
      %414 = vmatpush2.msra.mxu0 %v347
      %415 = vmatprep.subr.mxu0 %v346
      %416 = vmatpush2.msra.mxu0 %v345
      %417 = vmatprep.subr.mxu0 %v344
      %418 = vmatpush2.msra.mxu0 %v343
      %419 = vmatprep.subr.mxu0 %v342
      %420 = vmatpush2.msra.mxu0 %v341
      %421 = vmatprep.subr.mxu0 %v340
      %422 = vmatpush2.msra.mxu0 %v339
      %423 = vmatprep.subr.mxu0 %v338
      %424 = vmatpush2.msra.mxu0 %v337
      %425 = vmatprep.subr.mxu0 %v336
      %426 = vmatpush2.msra.mxu0 %v335
      %427 = vmatprep.subr.mxu0 %v334
      %428 = vmatpush2.msra.mxu0 %v333
      %429 = vmatprep.mubr.f32.mxu0 %v300
      %430 = vmatmul.mubr.f32.gmra.mxu0 %v299
      %v431 = vpop.f32.mrf.mxu0
      %v432 = vadd.f32 0.0, %v431
      %v433 = vpop.f32.mrf.mxu0
      %v434 = vadd.f32 0.0, %v433
      %435 = vdwg.mxu0
      %v436 = vld [vmem:[%s5] ss:$4 sm:$0x3]
      %v438 = vlaneseq
      %v439 = vshrl.u32 %v438, 7
      %v440 = vsub.s32 0, %v439
      %v441 = vrot.slane %v436, %v440
      %v442 = vlaneseq
      %v443 = vshrl.u32 %v442, 7
      %v444 = vsub.s32 1, %v443
      %v445 = vrot.slane %v436, %v444
      %v448 = vmul.f32 %v432, %v441
      %v449 = vmul.f32 %v434, %v445
      %s450 = scalar_lea.vmem %s5, 1
      %v451 = vld [vmem:[%s450] ss:$4 sm:$0x3]
      %v453 = vlaneseq
      %v454 = vshrl.u32 %v453, 7
      %v455 = vsub.s32 0, %v454
      %v456 = vrot.slane %v451, %v455
      %v457 = vlaneseq
      %v458 = vshrl.u32 %v457, 7
      %v459 = vsub.s32 1, %v458
      %v460 = vrot.slane %v451, %v459
      %v463 = vadd.f32 %v448, %v456
      %v464 = vadd.f32 %v449, %v460
      %v465 = vmax.f32 %v463, 0.0
      %v466 = vmax.f32 %v464, 0.0
      %s467 = scalar_lea.vmem %s5, 2
      %v468 = vld [vmem:[%s467] ss:$4 sm:$0x3]
      %v470 = vlaneseq
      %v471 = vshrl.u32 %v470, 7
      %v472 = vsub.s32 0, %v471
      %v473 = vrot.slane %v468, %v472
      %v474 = vlaneseq
      %v475 = vshrl.u32 %v474, 7
      %v476 = vsub.s32 1, %v475
      %v477 = vrot.slane %v468, %v476
      %v480 = vmul.f32 %v465, %v473
      %v481 = vmul.f32 %v466, %v477
      %s482 = scalar_lea.vmem %s5, 3
      %v483 = vld [vmem:[%s482] ss:$4 sm:$0x3]
      %v485 = vlaneseq
      %v486 = vshrl.u32 %v485, 7
      %v487 = vsub.s32 0, %v486
      %v488 = vrot.slane %v483, %v487
      %v489 = vlaneseq
      %v490 = vshrl.u32 %v489, 7
      %v491 = vsub.s32 1, %v490
      %v492 = vrot.slane %v483, %v491
      %v495 = vadd.f32 %v480, %v488
      %v496 = vadd.f32 %v481, %v492
      %v497 = vmax.f32 %v495, 0.0
      %v498 = vmax.f32 %v496, 0.0
      %499 = vst [vmem:[#allocation2] sm:$0xf] 0.0
      %500 = vst [vmem:[#allocation2 + $0x8] sm:$0xf] 0.0
      %501 = vst [vmem:[#allocation2 + $0x10] sm:$0xf0] 0.0
      %502 = vst [vmem:[#allocation2 + $0x18] sm:$0xf0] 0.0
      %v505 = vrot.slane %v497, 4
      %v506 = vrot.slane %v498, 4
      %509 = vst [vmem:[#allocation2] sm:$0xf0] %v505
      %510 = vst [vmem:[#allocation2 + $0x8] sm:$0xf0] %v506
      %511 = vst [vmem:[#allocation2 + $0x10] sm:$0xf] %v505
      %512 = vst [vmem:[#allocation2 + $0x18] sm:$0xf] %v506
      %v513 = vld [vmem:[#allocation2] sm:$0xff]
      %v514 = vld [vmem:[#allocation2 + $0x8] sm:$0xff]
      %v515 = vld [vmem:[%s3] sm:$0xff]
      %v516 = vld [vmem:[%s3 + $0x8] sm:$0xff]
      %v517 = vld [vmem:[%s3 + $0x10] sm:$0xff]
      %v518 = vld [vmem:[%s3 + $0x18] sm:$0xff]
      %v519 = vld [vmem:[%s3 + $0x20] sm:$0xff]
      %v520 = vld [vmem:[%s3 + $0x28] sm:$0xff]
      %v521 = vld [vmem:[%s3 + $0x30] sm:$0xff]
      %v522 = vld [vmem:[%s3 + $0x38] sm:$0xff]
      %v523 = vld [vmem:[%s3 + $0x40] sm:$0xff]
      %v524 = vld [vmem:[%s3 + $0x48] sm:$0xff]
      %v525 = vld [vmem:[%s3 + $0x50] sm:$0xff]
      %v526 = vld [vmem:[%s3 + $0x58] sm:$0xff]
      %v527 = vld [vmem:[%s3 + $0x60] sm:$0xff]
      %v528 = vld [vmem:[%s3 + $0x68] sm:$0xff]
      %v529 = vld [vmem:[%s3 + $0x70] sm:$0xff]
      %v530 = vld [vmem:[%s3 + $0x78] sm:$0xff]
      %v531 = vld [vmem:[%s3 + $0x80] sm:$0xff]
      %v532 = vld [vmem:[%s3 + $0x88] sm:$0xff]
      %v533 = vld [vmem:[%s3 + $0x90] sm:$0xff]
      %v534 = vld [vmem:[%s3 + $0x98] sm:$0xff]
      %v535 = vld [vmem:[%s3 + $0xa0] sm:$0xff]
      %v536 = vld [vmem:[%s3 + $0xa8] sm:$0xff]
      %v537 = vld [vmem:[%s3 + $0xb0] sm:$0xff]
      %v538 = vld [vmem:[%s3 + $0xb8] sm:$0xff]
      %v539 = vld [vmem:[%s3 + $0xc0] sm:$0xff]
      %v540 = vld [vmem:[%s3 + $0xc8] sm:$0xff]
      %v541 = vld [vmem:[%s3 + $0xd0] sm:$0xff]
      %v542 = vld [vmem:[%s3 + $0xd8] sm:$0xff]
      %v543 = vld [vmem:[%s3 + $0xe0] sm:$0xff]
      %v544 = vld [vmem:[%s3 + $0xe8] sm:$0xff]
      %v545 = vld [vmem:[%s3 + $0xf0] sm:$0xff]
      %v546 = vld [vmem:[%s3 + $0xf8] sm:$0xff]
      %v547 = vld [vmem:[%s3 + $0x100] sm:$0xff]
      %v548 = vld [vmem:[%s3 + $0x108] sm:$0xff]
      %v549 = vld [vmem:[%s3 + $0x110] sm:$0xff]
      %v550 = vld [vmem:[%s3 + $0x118] sm:$0xff]
      %v551 = vld [vmem:[%s3 + $0x120] sm:$0xff]
      %v552 = vld [vmem:[%s3 + $0x128] sm:$0xff]
      %v553 = vld [vmem:[%s3 + $0x130] sm:$0xff]
      %v554 = vld [vmem:[%s3 + $0x138] sm:$0xff]
      %v555 = vld [vmem:[%s3 + $0x140] sm:$0xff]
      %v556 = vld [vmem:[%s3 + $0x148] sm:$0xff]
      %v557 = vld [vmem:[%s3 + $0x150] sm:$0xff]
      %v558 = vld [vmem:[%s3 + $0x158] sm:$0xff]
      %v559 = vld [vmem:[%s3 + $0x160] sm:$0xff]
      %v560 = vld [vmem:[%s3 + $0x168] sm:$0xff]
      %v561 = vld [vmem:[%s3 + $0x170] sm:$0xff]
      %v562 = vld [vmem:[%s3 + $0x178] sm:$0xff]
      %v563 = vld [vmem:[%s3 + $0x180] sm:$0xff]
      %v564 = vld [vmem:[%s3 + $0x188] sm:$0xff]
      %v565 = vld [vmem:[%s3 + $0x190] sm:$0xff]
      %v566 = vld [vmem:[%s3 + $0x198] sm:$0xff]
      %v567 = vld [vmem:[%s3 + $0x1a0] sm:$0xff]
      %v568 = vld [vmem:[%s3 + $0x1a8] sm:$0xff]
      %v569 = vld [vmem:[%s3 + $0x1b0] sm:$0xff]
      %v570 = vld [vmem:[%s3 + $0x1b8] sm:$0xff]
      %v571 = vld [vmem:[%s3 + $0x1c0] sm:$0xff]
      %v572 = vld [vmem:[%s3 + $0x1c8] sm:$0xff]
      %v573 = vld [vmem:[%s3 + $0x1d0] sm:$0xff]
      %v574 = vld [vmem:[%s3 + $0x1d8] sm:$0xff]
      %v575 = vld [vmem:[%s3 + $0x1e0] sm:$0xff]
      %v576 = vld [vmem:[%s3 + $0x1e8] sm:$0xff]
      %v577 = vld [vmem:[%s3 + $0x1f0] sm:$0xff]
      %v578 = vld [vmem:[%s3 + $0x1f8] sm:$0xff]
      %v579 = vld [vmem:[#allocation2] sm:$0xfe]
      %v580 = vld [vmem:[#allocation2 + $0x8] sm:$0xfe]
      %v581 = vld [vmem:[#allocation2 + $0x10] sm:$0x1]
      %v582 = vld [vmem:[#allocation2 + $0x18] sm:$0x1]
      %s583 = scalar_lea.vmem %s3, 512
      %v584 = vld [vmem:[%s583] sm:$0xff]
      %v585 = vld [vmem:[%s583 + $0x8] sm:$0xff]
      %v586 = vld [vmem:[%s583 + $0x10] sm:$0xff]
      %v587 = vld [vmem:[%s583 + $0x18] sm:$0xff]
      %v588 = vld [vmem:[%s583 + $0x20] sm:$0xff]
      %v589 = vld [vmem:[%s583 + $0x28] sm:$0xff]
      %v590 = vld [vmem:[%s583 + $0x30] sm:$0xff]
      %v591 = vld [vmem:[%s583 + $0x38] sm:$0xff]
      %v592 = vld [vmem:[%s583 + $0x40] sm:$0xff]
      %v593 = vld [vmem:[%s583 + $0x48] sm:$0xff]
      %v594 = vld [vmem:[%s583 + $0x50] sm:$0xff]
      %v595 = vld [vmem:[%s583 + $0x58] sm:$0xff]
      %v596 = vld [vmem:[%s583 + $0x60] sm:$0xff]
      %v597 = vld [vmem:[%s583 + $0x68] sm:$0xff]
      %v598 = vld [vmem:[%s583 + $0x70] sm:$0xff]
      %v599 = vld [vmem:[%s583 + $0x78] sm:$0xff]
      %v600 = vld [vmem:[%s583 + $0x80] sm:$0xff]
      %v601 = vld [vmem:[%s583 + $0x88] sm:$0xff]
      %v602 = vld [vmem:[%s583 + $0x90] sm:$0xff]
      %v603 = vld [vmem:[%s583 + $0x98] sm:$0xff]
      %v604 = vld [vmem:[%s583 + $0xa0] sm:$0xff]
      %v605 = vld [vmem:[%s583 + $0xa8] sm:$0xff]
      %v606 = vld [vmem:[%s583 + $0xb0] sm:$0xff]
      %v607 = vld [vmem:[%s583 + $0xb8] sm:$0xff]
      %v608 = vld [vmem:[%s583 + $0xc0] sm:$0xff]
      %v609 = vld [vmem:[%s583 + $0xc8] sm:$0xff]
      %v610 = vld [vmem:[%s583 + $0xd0] sm:$0xff]
      %v611 = vld [vmem:[%s583 + $0xd8] sm:$0xff]
      %v612 = vld [vmem:[%s583 + $0xe0] sm:$0xff]
      %v613 = vld [vmem:[%s583 + $0xe8] sm:$0xff]
      %v614 = vld [vmem:[%s583 + $0xf0] sm:$0xff]
      %v615 = vld [vmem:[%s583 + $0xf8] sm:$0xff]
      %v616 = vld [vmem:[%s583 + $0x100] sm:$0xff]
      %v617 = vld [vmem:[%s583 + $0x108] sm:$0xff]
      %v618 = vld [vmem:[%s583 + $0x110] sm:$0xff]
      %v619 = vld [vmem:[%s583 + $0x118] sm:$0xff]
      %v620 = vld [vmem:[%s583 + $0x120] sm:$0xff]
      %v621 = vld [vmem:[%s583 + $0x128] sm:$0xff]
      %v622 = vld [vmem:[%s583 + $0x130] sm:$0xff]
      %v623 = vld [vmem:[%s583 + $0x138] sm:$0xff]
      %v624 = vld [vmem:[%s583 + $0x140] sm:$0xff]
      %v625 = vld [vmem:[%s583 + $0x148] sm:$0xff]
      %v626 = vld [vmem:[%s583 + $0x150] sm:$0xff]
      %v627 = vld [vmem:[%s583 + $0x158] sm:$0xff]
      %v628 = vld [vmem:[%s583 + $0x160] sm:$0xff]
      %v629 = vld [vmem:[%s583 + $0x168] sm:$0xff]
      %v630 = vld [vmem:[%s583 + $0x170] sm:$0xff]
      %v631 = vld [vmem:[%s583 + $0x178] sm:$0xff]
      %v632 = vld [vmem:[%s583 + $0x180] sm:$0xff]
      %v633 = vld [vmem:[%s583 + $0x188] sm:$0xff]
      %v634 = vld [vmem:[%s583 + $0x190] sm:$0xff]
      %v635 = vld [vmem:[%s583 + $0x198] sm:$0xff]
      %v636 = vld [vmem:[%s583 + $0x1a0] sm:$0xff]
      %v637 = vld [vmem:[%s583 + $0x1a8] sm:$0xff]
      %v638 = vld [vmem:[%s583 + $0x1b0] sm:$0xff]
      %v639 = vld [vmem:[%s583 + $0x1b8] sm:$0xff]
      %v640 = vld [vmem:[%s583 + $0x1c0] sm:$0xff]
      %v641 = vld [vmem:[%s583 + $0x1c8] sm:$0xff]
      %v642 = vld [vmem:[%s583 + $0x1d0] sm:$0xff]
      %v643 = vld [vmem:[%s583 + $0x1d8] sm:$0xff]
      %v644 = vld [vmem:[%s583 + $0x1e0] sm:$0xff]
      %v645 = vld [vmem:[%s583 + $0x1e8] sm:$0xff]
      %v646 = vld [vmem:[%s583 + $0x1f0] sm:$0xff]
      %v647 = vld [vmem:[%s583 + $0x1f8] sm:$0xff]
      %vm652 = vcmask 1046528
      %v653 = vrot.slane %v579, 1
      %v654 = vrot.slane %v581, 1
      %v655 = vsel %vm652, %v653, %v654
      %v656 = vrot.slane %v580, 1
      %v657 = vrot.slane %v582, 1
      %v658 = vsel %vm652, %v656, %v657
      %661 = vmatprep.subr.mxu0 %v615
      %662 = vmatpush1.msra.mxu0 %v614
      %663 = vmatprep.subr.mxu0 %v613
      %664 = vmatpush1.msra.mxu0 %v612
      %665 = vmatprep.subr.mxu0 %v611
      %666 = vmatpush1.msra.mxu0 %v610
      %667 = vmatprep.subr.mxu0 %v609
      %668 = vmatpush1.msra.mxu0 %v608
      %669 = vmatprep.subr.mxu0 %v607
      %670 = vmatpush1.msra.mxu0 %v606
      %671 = vmatprep.subr.mxu0 %v605
      %672 = vmatpush1.msra.mxu0 %v604
      %673 = vmatprep.subr.mxu0 %v603
      %674 = vmatpush1.msra.mxu0 %v602
      %675 = vmatprep.subr.mxu0 %v601
      %676 = vmatpush1.msra.mxu0 %v600
      %677 = vmatprep.subr.mxu0 %v599
      %678 = vmatpush1.msra.mxu0 %v598
      %679 = vmatprep.subr.mxu0 %v597
      %680 = vmatpush1.msra.mxu0 %v596
      %681 = vmatprep.subr.mxu0 %v595
      %682 = vmatpush1.msra.mxu0 %v594
      %683 = vmatprep.subr.mxu0 %v593
      %684 = vmatpush1.msra.mxu0 %v592
      %685 = vmatprep.subr.mxu0 %v591
      %686 = vmatpush1.msra.mxu0 %v590
      %687 = vmatprep.subr.mxu0 %v589
      %688 = vmatpush1.msra.mxu0 %v588
      %689 = vmatprep.subr.mxu0 %v587
      %690 = vmatpush1.msra.mxu0 %v586
      %691 = vmatprep.subr.mxu0 %v585
      %692 = vmatpush1.msra.mxu0 %v584
      %693 = vmatprep.subr.mxu0 %v647
      %694 = vmatpush2.msra.mxu0 %v646
      %695 = vmatprep.subr.mxu0 %v645
      %696 = vmatpush2.msra.mxu0 %v644
      %697 = vmatprep.subr.mxu0 %v643
      %698 = vmatpush2.msra.mxu0 %v642
      %699 = vmatprep.subr.mxu0 %v641
      %700 = vmatpush2.msra.mxu0 %v640
      %701 = vmatprep.subr.mxu0 %v639
      %702 = vmatpush2.msra.mxu0 %v638
      %703 = vmatprep.subr.mxu0 %v637
      %704 = vmatpush2.msra.mxu0 %v636
      %705 = vmatprep.subr.mxu0 %v635
      %706 = vmatpush2.msra.mxu0 %v634
      %707 = vmatprep.subr.mxu0 %v633
      %708 = vmatpush2.msra.mxu0 %v632
      %709 = vmatprep.subr.mxu0 %v631
      %710 = vmatpush2.msra.mxu0 %v630
      %711 = vmatprep.subr.mxu0 %v629
      %712 = vmatpush2.msra.mxu0 %v628
      %713 = vmatprep.subr.mxu0 %v627
      %714 = vmatpush2.msra.mxu0 %v626
      %715 = vmatprep.subr.mxu0 %v625
      %716 = vmatpush2.msra.mxu0 %v624
      %717 = vmatprep.subr.mxu0 %v623
      %718 = vmatpush2.msra.mxu0 %v622
      %719 = vmatprep.subr.mxu0 %v621
      %720 = vmatpush2.msra.mxu0 %v620
      %721 = vmatprep.subr.mxu0 %v619
      %722 = vmatpush2.msra.mxu0 %v618
      %723 = vmatprep.subr.mxu0 %v617
      %724 = vmatpush2.msra.mxu0 %v616
      %725 = vmatprep.mubr.f32.mxu0 %v658
      %726 = vmatmul.mubr.f32.gmra.mxu0 %v655
      %v727 = vpop.f32.mrf.mxu0
      %v728 = vadd.f32 0.0, %v727
      %v729 = vpop.f32.mrf.mxu0
      %v730 = vadd.f32 0.0, %v729
      %731 = vdwg.mxu0
      %732 = vmatprep.subr.mxu0 %v546
      %733 = vmatpush1.msra.mxu0 %v545
      %734 = vmatprep.subr.mxu0 %v544
      %735 = vmatpush1.msra.mxu0 %v543
      %736 = vmatprep.subr.mxu0 %v542
      %737 = vmatpush1.msra.mxu0 %v541
      %738 = vmatprep.subr.mxu0 %v540
      %739 = vmatpush1.msra.mxu0 %v539
      %740 = vmatprep.subr.mxu0 %v538
      %741 = vmatpush1.msra.mxu0 %v537
      %742 = vmatprep.subr.mxu0 %v536
      %743 = vmatpush1.msra.mxu0 %v535
      %744 = vmatprep.subr.mxu0 %v534
      %745 = vmatpush1.msra.mxu0 %v533
      %746 = vmatprep.subr.mxu0 %v532
      %747 = vmatpush1.msra.mxu0 %v531
      %748 = vmatprep.subr.mxu0 %v530
      %749 = vmatpush1.msra.mxu0 %v529
      %750 = vmatprep.subr.mxu0 %v528
      %751 = vmatpush1.msra.mxu0 %v527
      %752 = vmatprep.subr.mxu0 %v526
      %753 = vmatpush1.msra.mxu0 %v525
      %754 = vmatprep.subr.mxu0 %v524
      %755 = vmatpush1.msra.mxu0 %v523
      %756 = vmatprep.subr.mxu0 %v522
      %757 = vmatpush1.msra.mxu0 %v521
      %758 = vmatprep.subr.mxu0 %v520
      %759 = vmatpush1.msra.mxu0 %v519
      %760 = vmatprep.subr.mxu0 %v518
      %761 = vmatpush1.msra.mxu0 %v517
      %762 = vmatprep.subr.mxu0 %v516
      %763 = vmatpush1.msra.mxu0 %v515
      %764 = vmatprep.subr.mxu0 %v578
      %765 = vmatpush2.msra.mxu0 %v577
      %766 = vmatprep.subr.mxu0 %v576
      %767 = vmatpush2.msra.mxu0 %v575
      %768 = vmatprep.subr.mxu0 %v574
      %769 = vmatpush2.msra.mxu0 %v573
      %770 = vmatprep.subr.mxu0 %v572
      %771 = vmatpush2.msra.mxu0 %v571
      %772 = vmatprep.subr.mxu0 %v570
      %773 = vmatpush2.msra.mxu0 %v569
      %774 = vmatprep.subr.mxu0 %v568
      %775 = vmatpush2.msra.mxu0 %v567
      %776 = vmatprep.subr.mxu0 %v566
      %777 = vmatpush2.msra.mxu0 %v565
      %778 = vmatprep.subr.mxu0 %v564
      %779 = vmatpush2.msra.mxu0 %v563
      %780 = vmatprep.subr.mxu0 %v562
      %781 = vmatpush2.msra.mxu0 %v561
      %782 = vmatprep.subr.mxu0 %v560
      %783 = vmatpush2.msra.mxu0 %v559
      %784 = vmatprep.subr.mxu0 %v558
      %785 = vmatpush2.msra.mxu0 %v557
      %786 = vmatprep.subr.mxu0 %v556
      %787 = vmatpush2.msra.mxu0 %v555
      %788 = vmatprep.subr.mxu0 %v554
      %789 = vmatpush2.msra.mxu0 %v553
      %790 = vmatprep.subr.mxu0 %v552
      %791 = vmatpush2.msra.mxu0 %v551
      %792 = vmatprep.subr.mxu0 %v550
      %793 = vmatpush2.msra.mxu0 %v549
      %794 = vmatprep.subr.mxu0 %v548
      %795 = vmatpush2.msra.mxu0 %v547
      %796 = vmatprep.mubr.f32.mxu0 %v514
      %797 = vmatmul.mubr.f32.gmra.mxu0 %v513
      %v798 = vpop.f32.mrf.mxu0
      %v799 = vadd.f32 %v728, %v798
      %v800 = vpop.f32.mrf.mxu0
      %v801 = vadd.f32 %v730, %v800
      %802 = vdwg.mxu0
      %v803 = vld [vmem:[#allocation2] sm:$0xfc]
      %v804 = vld [vmem:[#allocation2 + $0x8] sm:$0xfc]
      %v805 = vld [vmem:[#allocation2 + $0x10] sm:$0x3]
      %v806 = vld [vmem:[#allocation2 + $0x18] sm:$0x3]
      %s807 = scalar_lea.vmem %s3, 1024
      %v808 = vld [vmem:[%s807] sm:$0xff]
      %v809 = vld [vmem:[%s807 + $0x8] sm:$0xff]
      %v810 = vld [vmem:[%s807 + $0x10] sm:$0xff]
      %v811 = vld [vmem:[%s807 + $0x18] sm:$0xff]
      %v812 = vld [vmem:[%s807 + $0x20] sm:$0xff]
      %v813 = vld [vmem:[%s807 + $0x28] sm:$0xff]
      %v814 = vld [vmem:[%s807 + $0x30] sm:$0xff]
      %v815 = vld [vmem:[%s807 + $0x38] sm:$0xff]
      %v816 = vld [vmem:[%s807 + $0x40] sm:$0xff]
      %v817 = vld [vmem:[%s807 + $0x48] sm:$0xff]
      %v818 = vld [vmem:[%s807 + $0x50] sm:$0xff]
      %v819 = vld [vmem:[%s807 + $0x58] sm:$0xff]
      %v820 = vld [vmem:[%s807 + $0x60] sm:$0xff]
      %v821 = vld [vmem:[%s807 + $0x68] sm:$0xff]
      %v822 = vld [vmem:[%s807 + $0x70] sm:$0xff]
      %v823 = vld [vmem:[%s807 + $0x78] sm:$0xff]
      %v824 = vld [vmem:[%s807 + $0x80] sm:$0xff]
      %v825 = vld [vmem:[%s807 + $0x88] sm:$0xff]
      %v826 = vld [vmem:[%s807 + $0x90] sm:$0xff]
      %v827 = vld [vmem:[%s807 + $0x98] sm:$0xff]
      %v828 = vld [vmem:[%s807 + $0xa0] sm:$0xff]
      %v829 = vld [vmem:[%s807 + $0xa8] sm:$0xff]
      %v830 = vld [vmem:[%s807 + $0xb0] sm:$0xff]
      %v831 = vld [vmem:[%s807 + $0xb8] sm:$0xff]
      %v832 = vld [vmem:[%s807 + $0xc0] sm:$0xff]
      %v833 = vld [vmem:[%s807 + $0xc8] sm:$0xff]
      %v834 = vld [vmem:[%s807 + $0xd0] sm:$0xff]
      %v835 = vld [vmem:[%s807 + $0xd8] sm:$0xff]
      %v836 = vld [vmem:[%s807 + $0xe0] sm:$0xff]
      %v837 = vld [vmem:[%s807 + $0xe8] sm:$0xff]
      %v838 = vld [vmem:[%s807 + $0xf0] sm:$0xff]
      %v839 = vld [vmem:[%s807 + $0xf8] sm:$0xff]
      %v840 = vld [vmem:[%s807 + $0x100] sm:$0xff]
      %v841 = vld [vmem:[%s807 + $0x108] sm:$0xff]
      %v842 = vld [vmem:[%s807 + $0x110] sm:$0xff]
      %v843 = vld [vmem:[%s807 + $0x118] sm:$0xff]
      %v844 = vld [vmem:[%s807 + $0x120] sm:$0xff]
      %v845 = vld [vmem:[%s807 + $0x128] sm:$0xff]
      %v846 = vld [vmem:[%s807 + $0x130] sm:$0xff]
      %v847 = vld [vmem:[%s807 + $0x138] sm:$0xff]
      %v848 = vld [vmem:[%s807 + $0x140] sm:$0xff]
      %v849 = vld [vmem:[%s807 + $0x148] sm:$0xff]
      %v850 = vld [vmem:[%s807 + $0x150] sm:$0xff]
      %v851 = vld [vmem:[%s807 + $0x158] sm:$0xff]
      %v852 = vld [vmem:[%s807 + $0x160] sm:$0xff]
      %v853 = vld [vmem:[%s807 + $0x168] sm:$0xff]
      %v854 = vld [vmem:[%s807 + $0x170] sm:$0xff]
      %v855 = vld [vmem:[%s807 + $0x178] sm:$0xff]
      %v856 = vld [vmem:[%s807 + $0x180] sm:$0xff]
      %v857 = vld [vmem:[%s807 + $0x188] sm:$0xff]
      %v858 = vld [vmem:[%s807 + $0x190] sm:$0xff]
      %v859 = vld [vmem:[%s807 + $0x198] sm:$0xff]
      %v860 = vld [vmem:[%s807 + $0x1a0] sm:$0xff]
      %v861 = vld [vmem:[%s807 + $0x1a8] sm:$0xff]
      %v862 = vld [vmem:[%s807 + $0x1b0] sm:$0xff]
      %v863 = vld [vmem:[%s807 + $0x1b8] sm:$0xff]
      %v864 = vld [vmem:[%s807 + $0x1c0] sm:$0xff]
      %v865 = vld [vmem:[%s807 + $0x1c8] sm:$0xff]
      %v866 = vld [vmem:[%s807 + $0x1d0] sm:$0xff]
      %v867 = vld [vmem:[%s807 + $0x1d8] sm:$0xff]
      %v868 = vld [vmem:[%s807 + $0x1e0] sm:$0xff]
      %v869 = vld [vmem:[%s807 + $0x1e8] sm:$0xff]
      %v870 = vld [vmem:[%s807 + $0x1f0] sm:$0xff]
      %v871 = vld [vmem:[%s807 + $0x1f8] sm:$0xff]
      %vm876 = vcmask 1045504
      %v877 = vrot.slane %v803, 2
      %v878 = vrot.slane %v805, 2
      %v879 = vsel %vm876, %v877, %v878
      %v880 = vrot.slane %v804, 2
      %v881 = vrot.slane %v806, 2
      %v882 = vsel %vm876, %v880, %v881
      %885 = vmatprep.subr.mxu0 %v839
      %886 = vmatpush1.msra.mxu0 %v838
      %887 = vmatprep.subr.mxu0 %v837
      %888 = vmatpush1.msra.mxu0 %v836
      %889 = vmatprep.subr.mxu0 %v835
      %890 = vmatpush1.msra.mxu0 %v834
      %891 = vmatprep.subr.mxu0 %v833
      %892 = vmatpush1.msra.mxu0 %v832
      %893 = vmatprep.subr.mxu0 %v831
      %894 = vmatpush1.msra.mxu0 %v830
      %895 = vmatprep.subr.mxu0 %v829
      %896 = vmatpush1.msra.mxu0 %v828
      %897 = vmatprep.subr.mxu0 %v827
      %898 = vmatpush1.msra.mxu0 %v826
      %899 = vmatprep.subr.mxu0 %v825
      %900 = vmatpush1.msra.mxu0 %v824
      %901 = vmatprep.subr.mxu0 %v823
      %902 = vmatpush1.msra.mxu0 %v822
      %903 = vmatprep.subr.mxu0 %v821
      %904 = vmatpush1.msra.mxu0 %v820
      %905 = vmatprep.subr.mxu0 %v819
      %906 = vmatpush1.msra.mxu0 %v818
      %907 = vmatprep.subr.mxu0 %v817
      %908 = vmatpush1.msra.mxu0 %v816
      %909 = vmatprep.subr.mxu0 %v815
      %910 = vmatpush1.msra.mxu0 %v814
      %911 = vmatprep.subr.mxu0 %v813
      %912 = vmatpush1.msra.mxu0 %v812
      %913 = vmatprep.subr.mxu0 %v811
      %914 = vmatpush1.msra.mxu0 %v810
      %915 = vmatprep.subr.mxu0 %v809
      %916 = vmatpush1.msra.mxu0 %v808
      %917 = vmatprep.subr.mxu0 %v871
      %918 = vmatpush2.msra.mxu0 %v870
      %919 = vmatprep.subr.mxu0 %v869
      %920 = vmatpush2.msra.mxu0 %v868
      %921 = vmatprep.subr.mxu0 %v867
      %922 = vmatpush2.msra.mxu0 %v866
      %923 = vmatprep.subr.mxu0 %v865
      %924 = vmatpush2.msra.mxu0 %v864
      %925 = vmatprep.subr.mxu0 %v863
      %926 = vmatpush2.msra.mxu0 %v862
      %927 = vmatprep.subr.mxu0 %v861
      %928 = vmatpush2.msra.mxu0 %v860
      %929 = vmatprep.subr.mxu0 %v859
      %930 = vmatpush2.msra.mxu0 %v858
      %931 = vmatprep.subr.mxu0 %v857
      %932 = vmatpush2.msra.mxu0 %v856
      %933 = vmatprep.subr.mxu0 %v855
      %934 = vmatpush2.msra.mxu0 %v854
      %935 = vmatprep.subr.mxu0 %v853
      %936 = vmatpush2.msra.mxu0 %v852
      %937 = vmatprep.subr.mxu0 %v851
      %938 = vmatpush2.msra.mxu0 %v850
      %939 = vmatprep.subr.mxu0 %v849
      %940 = vmatpush2.msra.mxu0 %v848
      %941 = vmatprep.subr.mxu0 %v847
      %942 = vmatpush2.msra.mxu0 %v846
      %943 = vmatprep.subr.mxu0 %v845
      %944 = vmatpush2.msra.mxu0 %v844
      %945 = vmatprep.subr.mxu0 %v843
      %946 = vmatpush2.msra.mxu0 %v842
      %947 = vmatprep.subr.mxu0 %v841
      %948 = vmatpush2.msra.mxu0 %v840
      %949 = vmatprep.mubr.f32.mxu0 %v882
      %950 = vmatmul.mubr.f32.gmra.mxu0 %v879
      %v951 = vpop.f32.mrf.mxu0
      %v952 = vadd.f32 0.0, %v951
      %v953 = vpop.f32.mrf.mxu0
      %v954 = vadd.f32 0.0, %v953
      %955 = vdwg.mxu0
      %v956 = vadd.f32 %v799, %v952
      %v957 = vadd.f32 %v801, %v954
      %v958 = vld [vmem:[#allocation2] sm:$0xf8]
      %v959 = vld [vmem:[#allocation2 + $0x8] sm:$0xf8]
      %v960 = vld [vmem:[#allocation2 + $0x10] sm:$0x7]
      %v961 = vld [vmem:[#allocation2 + $0x18] sm:$0x7]
      %s962 = scalar_lea.vmem %s3, 1536
      %v963 = vld [vmem:[%s962] sm:$0xff]
      %v964 = vld [vmem:[%s962 + $0x8] sm:$0xff]
      %v965 = vld [vmem:[%s962 + $0x10] sm:$0xff]
      %v966 = vld [vmem:[%s962 + $0x18] sm:$0xff]
      %v967 = vld [vmem:[%s962 + $0x20] sm:$0xff]
      %v968 = vld [vmem:[%s962 + $0x28] sm:$0xff]
      %v969 = vld [vmem:[%s962 + $0x30] sm:$0xff]
      %v970 = vld [vmem:[%s962 + $0x38] sm:$0xff]
      %v971 = vld [vmem:[%s962 + $0x40] sm:$0xff]
      %v972 = vld [vmem:[%s962 + $0x48] sm:$0xff]
      %v973 = vld [vmem:[%s962 + $0x50] sm:$0xff]
      %v974 = vld [vmem:[%s962 + $0x58] sm:$0xff]
      %v975 = vld [vmem:[%s962 + $0x60] sm:$0xff]
      %v976 = vld [vmem:[%s962 + $0x68] sm:$0xff]
      %v977 = vld [vmem:[%s962 + $0x70] sm:$0xff]
      %v978 = vld [vmem:[%s962 + $0x78] sm:$0xff]
      %v979 = vld [vmem:[%s962 + $0x80] sm:$0xff]
      %v980 = vld [vmem:[%s962 + $0x88] sm:$0xff]
      %v981 = vld [vmem:[%s962 + $0x90] sm:$0xff]
      %v982 = vld [vmem:[%s962 + $0x98] sm:$0xff]
      %v983 = vld [vmem:[%s962 + $0xa0] sm:$0xff]
      %v984 = vld [vmem:[%s962 + $0xa8] sm:$0xff]
      %v985 = vld [vmem:[%s962 + $0xb0] sm:$0xff]
      %v986 = vld [vmem:[%s962 + $0xb8] sm:$0xff]
      %v987 = vld [vmem:[%s962 + $0xc0] sm:$0xff]
      %v988 = vld [vmem:[%s962 + $0xc8] sm:$0xff]
      %v989 = vld [vmem:[%s962 + $0xd0] sm:$0xff]
      %v990 = vld [vmem:[%s962 + $0xd8] sm:$0xff]
      %v991 = vld [vmem:[%s962 + $0xe0] sm:$0xff]
      %v992 = vld [vmem:[%s962 + $0xe8] sm:$0xff]
      %v993 = vld [vmem:[%s962 + $0xf0] sm:$0xff]
      %v994 = vld [vmem:[%s962 + $0xf8] sm:$0xff]
      %v995 = vld [vmem:[%s962 + $0x100] sm:$0xff]
      %v996 = vld [vmem:[%s962 + $0x108] sm:$0xff]
      %v997 = vld [vmem:[%s962 + $0x110] sm:$0xff]
      %v998 = vld [vmem:[%s962 + $0x118] sm:$0xff]
      %v999 = vld [vmem:[%s962 + $0x120] sm:$0xff]
      %v1000 = vld [vmem:[%s962 + $0x128] sm:$0xff]
      %v1001 = vld [vmem:[%s962 + $0x130] sm:$0xff]
      %v1002 = vld [vmem:[%s962 + $0x138] sm:$0xff]
      %v1003 = vld [vmem:[%s962 + $0x140] sm:$0xff]
      %v1004 = vld [vmem:[%s962 + $0x148] sm:$0xff]
      %v1005 = vld [vmem:[%s962 + $0x150] sm:$0xff]
      %v1006 = vld [vmem:[%s962 + $0x158] sm:$0xff]
      %v1007 = vld [vmem:[%s962 + $0x160] sm:$0xff]
      %v1008 = vld [vmem:[%s962 + $0x168] sm:$0xff]
      %v1009 = vld [vmem:[%s962 + $0x170] sm:$0xff]
      %v1010 = vld [vmem:[%s962 + $0x178] sm:$0xff]
      %v1011 = vld [vmem:[%s962 + $0x180] sm:$0xff]
      %v1012 = vld [vmem:[%s962 + $0x188] sm:$0xff]
      %v1013 = vld [vmem:[%s962 + $0x190] sm:$0xff]
      %v1014 = vld [vmem:[%s962 + $0x198] sm:$0xff]
      %v1015 = vld [vmem:[%s962 + $0x1a0] sm:$0xff]
      %v1016 = vld [vmem:[%s962 + $0x1a8] sm:$0xff]
      %v1017 = vld [vmem:[%s962 + $0x1b0] sm:$0xff]
      %v1018 = vld [vmem:[%s962 + $0x1b8] sm:$0xff]
      %v1019 = vld [vmem:[%s962 + $0x1c0] sm:$0xff]
      %v1020 = vld [vmem:[%s962 + $0x1c8] sm:$0xff]
      %v1021 = vld [vmem:[%s962 + $0x1d0] sm:$0xff]
      %v1022 = vld [vmem:[%s962 + $0x1d8] sm:$0xff]
      %v1023 = vld [vmem:[%s962 + $0x1e0] sm:$0xff]
      %v1024 = vld [vmem:[%s962 + $0x1e8] sm:$0xff]
      %v1025 = vld [vmem:[%s962 + $0x1f0] sm:$0xff]
      %v1026 = vld [vmem:[%s962 + $0x1f8] sm:$0xff]
      %vm1031 = vcmask 1044480
      %v1032 = vrot.slane %v958, 3
      %v1033 = vrot.slane %v960, 3
      %v1034 = vsel %vm1031, %v1032, %v1033
      %v1035 = vrot.slane %v959, 3
      %v1036 = vrot.slane %v961, 3
      %v1037 = vsel %vm1031, %v1035, %v1036
      %1040 = vmatprep.subr.mxu0 %v994
      %1041 = vmatpush1.msra.mxu0 %v993
      %1042 = vmatprep.subr.mxu0 %v992
      %1043 = vmatpush1.msra.mxu0 %v991
      %1044 = vmatprep.subr.mxu0 %v990
      %1045 = vmatpush1.msra.mxu0 %v989
      %1046 = vmatprep.subr.mxu0 %v988
      %1047 = vmatpush1.msra.mxu0 %v987
      %1048 = vmatprep.subr.mxu0 %v986
      %1049 = vmatpush1.msra.mxu0 %v985
      %1050 = vmatprep.subr.mxu0 %v984
      %1051 = vmatpush1.msra.mxu0 %v983
      %1052 = vmatprep.subr.mxu0 %v982
      %1053 = vmatpush1.msra.mxu0 %v981
      %1054 = vmatprep.subr.mxu0 %v980
      %1055 = vmatpush1.msra.mxu0 %v979
      %1056 = vmatprep.subr.mxu0 %v978
      %1057 = vmatpush1.msra.mxu0 %v977
      %1058 = vmatprep.subr.mxu0 %v976
      %1059 = vmatpush1.msra.mxu0 %v975
      %1060 = vmatprep.subr.mxu0 %v974
      %1061 = vmatpush1.msra.mxu0 %v973
      %1062 = vmatprep.subr.mxu0 %v972
      %1063 = vmatpush1.msra.mxu0 %v971
      %1064 = vmatprep.subr.mxu0 %v970
      %1065 = vmatpush1.msra.mxu0 %v969
      %1066 = vmatprep.subr.mxu0 %v968
      %1067 = vmatpush1.msra.mxu0 %v967
      %1068 = vmatprep.subr.mxu0 %v966
      %1069 = vmatpush1.msra.mxu0 %v965
      %1070 = vmatprep.subr.mxu0 %v964
      %1071 = vmatpush1.msra.mxu0 %v963
      %1072 = vmatprep.subr.mxu0 %v1026
      %1073 = vmatpush2.msra.mxu0 %v1025
      %1074 = vmatprep.subr.mxu0 %v1024
      %1075 = vmatpush2.msra.mxu0 %v1023
      %1076 = vmatprep.subr.mxu0 %v1022
      %1077 = vmatpush2.msra.mxu0 %v1021
      %1078 = vmatprep.subr.mxu0 %v1020
      %1079 = vmatpush2.msra.mxu0 %v1019
      %1080 = vmatprep.subr.mxu0 %v1018
      %1081 = vmatpush2.msra.mxu0 %v1017
      %1082 = vmatprep.subr.mxu0 %v1016
      %1083 = vmatpush2.msra.mxu0 %v1015
      %1084 = vmatprep.subr.mxu0 %v1014
      %1085 = vmatpush2.msra.mxu0 %v1013
      %1086 = vmatprep.subr.mxu0 %v1012
      %1087 = vmatpush2.msra.mxu0 %v1011
      %1088 = vmatprep.subr.mxu0 %v1010
      %1089 = vmatpush2.msra.mxu0 %v1009
      %1090 = vmatprep.subr.mxu0 %v1008
      %1091 = vmatpush2.msra.mxu0 %v1007
      %1092 = vmatprep.subr.mxu0 %v1006
      %1093 = vmatpush2.msra.mxu0 %v1005
      %1094 = vmatprep.subr.mxu0 %v1004
      %1095 = vmatpush2.msra.mxu0 %v1003
      %1096 = vmatprep.subr.mxu0 %v1002
      %1097 = vmatpush2.msra.mxu0 %v1001
      %1098 = vmatprep.subr.mxu0 %v1000
      %1099 = vmatpush2.msra.mxu0 %v999
      %1100 = vmatprep.subr.mxu0 %v998
      %1101 = vmatpush2.msra.mxu0 %v997
      %1102 = vmatprep.subr.mxu0 %v996
      %1103 = vmatpush2.msra.mxu0 %v995
      %1104 = vmatprep.mubr.f32.mxu0 %v1037
      %1105 = vmatmul.mubr.f32.gmra.mxu0 %v1034
      %v1106 = vpop.f32.mrf.mxu0
      %v1107 = vadd.f32 0.0, %v1106
      %v1108 = vpop.f32.mrf.mxu0
      %v1109 = vadd.f32 0.0, %v1108
      %1110 = vdwg.mxu0
      %v1111 = vadd.f32 %v956, %v1107
      %v1112 = vadd.f32 %v957, %v1109
      %v1113 = vld [vmem:[#allocation2] sm:$0xf0]
      %v1114 = vld [vmem:[#allocation2 + $0x8] sm:$0xf0]
      %v1115 = vld [vmem:[#allocation2 + $0x10] sm:$0xf]
      %v1116 = vld [vmem:[#allocation2 + $0x18] sm:$0xf]
      %s1117 = scalar_lea.vmem %s3, 2048
      %v1118 = vld [vmem:[%s1117] sm:$0xff]
      %v1119 = vld [vmem:[%s1117 + $0x8] sm:$0xff]
      %v1120 = vld [vmem:[%s1117 + $0x10] sm:$0xff]
      %v1121 = vld [vmem:[%s1117 + $0x18] sm:$0xff]
      %v1122 = vld [vmem:[%s1117 + $0x20] sm:$0xff]
      %v1123 = vld [vmem:[%s1117 + $0x28] sm:$0xff]
      %v1124 = vld [vmem:[%s1117 + $0x30] sm:$0xff]
      %v1125 = vld [vmem:[%s1117 + $0x38] sm:$0xff]
      %v1126 = vld [vmem:[%s1117 + $0x40] sm:$0xff]
      %v1127 = vld [vmem:[%s1117 + $0x48] sm:$0xff]
      %v1128 = vld [vmem:[%s1117 + $0x50] sm:$0xff]
      %v1129 = vld [vmem:[%s1117 + $0x58] sm:$0xff]
      %v1130 = vld [vmem:[%s1117 + $0x60] sm:$0xff]
      %v1131 = vld [vmem:[%s1117 + $0x68] sm:$0xff]
      %v1132 = vld [vmem:[%s1117 + $0x70] sm:$0xff]
      %v1133 = vld [vmem:[%s1117 + $0x78] sm:$0xff]
      %v1134 = vld [vmem:[%s1117 + $0x80] sm:$0xff]
      %v1135 = vld [vmem:[%s1117 + $0x88] sm:$0xff]
      %v1136 = vld [vmem:[%s1117 + $0x90] sm:$0xff]
      %v1137 = vld [vmem:[%s1117 + $0x98] sm:$0xff]
      %v1138 = vld [vmem:[%s1117 + $0xa0] sm:$0xff]
      %v1139 = vld [vmem:[%s1117 + $0xa8] sm:$0xff]
      %v1140 = vld [vmem:[%s1117 + $0xb0] sm:$0xff]
      %v1141 = vld [vmem:[%s1117 + $0xb8] sm:$0xff]
      %v1142 = vld [vmem:[%s1117 + $0xc0] sm:$0xff]
      %v1143 = vld [vmem:[%s1117 + $0xc8] sm:$0xff]
      %v1144 = vld [vmem:[%s1117 + $0xd0] sm:$0xff]
      %v1145 = vld [vmem:[%s1117 + $0xd8] sm:$0xff]
      %v1146 = vld [vmem:[%s1117 + $0xe0] sm:$0xff]
      %v1147 = vld [vmem:[%s1117 + $0xe8] sm:$0xff]
      %v1148 = vld [vmem:[%s1117 + $0xf0] sm:$0xff]
      %v1149 = vld [vmem:[%s1117 + $0xf8] sm:$0xff]
      %v1150 = vld [vmem:[%s1117 + $0x100] sm:$0xff]
      %v1151 = vld [vmem:[%s1117 + $0x108] sm:$0xff]
      %v1152 = vld [vmem:[%s1117 + $0x110] sm:$0xff]
      %v1153 = vld [vmem:[%s1117 + $0x118] sm:$0xff]
      %v1154 = vld [vmem:[%s1117 + $0x120] sm:$0xff]
      %v1155 = vld [vmem:[%s1117 + $0x128] sm:$0xff]
      %v1156 = vld [vmem:[%s1117 + $0x130] sm:$0xff]
      %v1157 = vld [vmem:[%s1117 + $0x138] sm:$0xff]
      %v1158 = vld [vmem:[%s1117 + $0x140] sm:$0xff]
      %v1159 = vld [vmem:[%s1117 + $0x148] sm:$0xff]
      %v1160 = vld [vmem:[%s1117 + $0x150] sm:$0xff]
      %v1161 = vld [vmem:[%s1117 + $0x158] sm:$0xff]
      %v1162 = vld [vmem:[%s1117 + $0x160] sm:$0xff]
      %v1163 = vld [vmem:[%s1117 + $0x168] sm:$0xff]
      %v1164 = vld [vmem:[%s1117 + $0x170] sm:$0xff]
      %v1165 = vld [vmem:[%s1117 + $0x178] sm:$0xff]
      %v1166 = vld [vmem:[%s1117 + $0x180] sm:$0xff]
      %v1167 = vld [vmem:[%s1117 + $0x188] sm:$0xff]
      %v1168 = vld [vmem:[%s1117 + $0x190] sm:$0xff]
      %v1169 = vld [vmem:[%s1117 + $0x198] sm:$0xff]
      %v1170 = vld [vmem:[%s1117 + $0x1a0] sm:$0xff]
      %v1171 = vld [vmem:[%s1117 + $0x1a8] sm:$0xff]
      %v1172 = vld [vmem:[%s1117 + $0x1b0] sm:$0xff]
      %v1173 = vld [vmem:[%s1117 + $0x1b8] sm:$0xff]
      %v1174 = vld [vmem:[%s1117 + $0x1c0] sm:$0xff]
      %v1175 = vld [vmem:[%s1117 + $0x1c8] sm:$0xff]
      %v1176 = vld [vmem:[%s1117 + $0x1d0] sm:$0xff]
      %v1177 = vld [vmem:[%s1117 + $0x1d8] sm:$0xff]
      %v1178 = vld [vmem:[%s1117 + $0x1e0] sm:$0xff]
      %v1179 = vld [vmem:[%s1117 + $0x1e8] sm:$0xff]
      %v1180 = vld [vmem:[%s1117 + $0x1f0] sm:$0xff]
      %v1181 = vld [vmem:[%s1117 + $0x1f8] sm:$0xff]
      %vm1186 = vcmask 1043456
      %v1187 = vrot.slane %v1113, 4
      %v1188 = vrot.slane %v1115, 4
      %v1189 = vsel %vm1186, %v1187, %v1188
      %v1190 = vrot.slane %v1114, 4
      %v1191 = vrot.slane %v1116, 4
      %v1192 = vsel %vm1186, %v1190, %v1191
      %1195 = vmatprep.subr.mxu0 %v1149
      %1196 = vmatpush1.msra.mxu0 %v1148
      %1197 = vmatprep.subr.mxu0 %v1147
      %1198 = vmatpush1.msra.mxu0 %v1146
      %1199 = vmatprep.subr.mxu0 %v1145
      %1200 = vmatpush1.msra.mxu0 %v1144
      %1201 = vmatprep.subr.mxu0 %v1143
      %1202 = vmatpush1.msra.mxu0 %v1142
      %1203 = vmatprep.subr.mxu0 %v1141
      %1204 = vmatpush1.msra.mxu0 %v1140
      %1205 = vmatprep.subr.mxu0 %v1139
      %1206 = vmatpush1.msra.mxu0 %v1138
      %1207 = vmatprep.subr.mxu0 %v1137
      %1208 = vmatpush1.msra.mxu0 %v1136
      %1209 = vmatprep.subr.mxu0 %v1135
      %1210 = vmatpush1.msra.mxu0 %v1134
      %1211 = vmatprep.subr.mxu0 %v1133
      %1212 = vmatpush1.msra.mxu0 %v1132
      %1213 = vmatprep.subr.mxu0 %v1131
      %1214 = vmatpush1.msra.mxu0 %v1130
      %1215 = vmatprep.subr.mxu0 %v1129
      %1216 = vmatpush1.msra.mxu0 %v1128
      %1217 = vmatprep.subr.mxu0 %v1127
      %1218 = vmatpush1.msra.mxu0 %v1126
      %1219 = vmatprep.subr.mxu0 %v1125
      %1220 = vmatpush1.msra.mxu0 %v1124
      %1221 = vmatprep.subr.mxu0 %v1123
      %1222 = vmatpush1.msra.mxu0 %v1122
      %1223 = vmatprep.subr.mxu0 %v1121
      %1224 = vmatpush1.msra.mxu0 %v1120
      %1225 = vmatprep.subr.mxu0 %v1119
      %1226 = vmatpush1.msra.mxu0 %v1118
      %1227 = vmatprep.subr.mxu0 %v1181
      %1228 = vmatpush2.msra.mxu0 %v1180
      %1229 = vmatprep.subr.mxu0 %v1179
      %1230 = vmatpush2.msra.mxu0 %v1178
      %1231 = vmatprep.subr.mxu0 %v1177
      %1232 = vmatpush2.msra.mxu0 %v1176
      %1233 = vmatprep.subr.mxu0 %v1175
      %1234 = vmatpush2.msra.mxu0 %v1174
      %1235 = vmatprep.subr.mxu0 %v1173
      %1236 = vmatpush2.msra.mxu0 %v1172
      %1237 = vmatprep.subr.mxu0 %v1171
      %1238 = vmatpush2.msra.mxu0 %v1170
      %1239 = vmatprep.subr.mxu0 %v1169
      %1240 = vmatpush2.msra.mxu0 %v1168
      %1241 = vmatprep.subr.mxu0 %v1167
      %1242 = vmatpush2.msra.mxu0 %v1166
      %1243 = vmatprep.subr.mxu0 %v1165
      %1244 = vmatpush2.msra.mxu0 %v1164
      %1245 = vmatprep.subr.mxu0 %v1163
      %1246 = vmatpush2.msra.mxu0 %v1162
      %1247 = vmatprep.subr.mxu0 %v1161
      %1248 = vmatpush2.msra.mxu0 %v1160
      %1249 = vmatprep.subr.mxu0 %v1159
      %1250 = vmatpush2.msra.mxu0 %v1158
      %1251 = vmatprep.subr.mxu0 %v1157
      %1252 = vmatpush2.msra.mxu0 %v1156
      %1253 = vmatprep.subr.mxu0 %v1155
      %1254 = vmatpush2.msra.mxu0 %v1154
      %1255 = vmatprep.subr.mxu0 %v1153
      %1256 = vmatpush2.msra.mxu0 %v1152
      %1257 = vmatprep.subr.mxu0 %v1151
      %1258 = vmatpush2.msra.mxu0 %v1150
      %1259 = vmatprep.mubr.f32.mxu0 %v1192
      %1260 = vmatmul.mubr.f32.gmra.mxu0 %v1189
      %v1261 = vpop.f32.mrf.mxu0
      %v1262 = vadd.f32 0.0, %v1261
      %v1263 = vpop.f32.mrf.mxu0
      %v1264 = vadd.f32 0.0, %v1263
      %1265 = vdwg.mxu0
      %v1266 = vadd.f32 %v1111, %v1262
      %v1267 = vadd.f32 %v1112, %v1264
      %v1268 = vld [vmem:[#allocation2] sm:$0xe0]
      %v1269 = vld [vmem:[#allocation2 + $0x8] sm:$0xe0]
      %v1270 = vld [vmem:[#allocation2 + $0x10] sm:$0x1f]
      %v1271 = vld [vmem:[#allocation2 + $0x18] sm:$0x1f]
      %s1272 = scalar_lea.vmem %s3, 2560
      %v1273 = vld [vmem:[%s1272] sm:$0xff]
      %v1274 = vld [vmem:[%s1272 + $0x8] sm:$0xff]
      %v1275 = vld [vmem:[%s1272 + $0x10] sm:$0xff]
      %v1276 = vld [vmem:[%s1272 + $0x18] sm:$0xff]
      %v1277 = vld [vmem:[%s1272 + $0x20] sm:$0xff]
      %v1278 = vld [vmem:[%s1272 + $0x28] sm:$0xff]
      %v1279 = vld [vmem:[%s1272 + $0x30] sm:$0xff]
      %v1280 = vld [vmem:[%s1272 + $0x38] sm:$0xff]
      %v1281 = vld [vmem:[%s1272 + $0x40] sm:$0xff]
      %v1282 = vld [vmem:[%s1272 + $0x48] sm:$0xff]
      %v1283 = vld [vmem:[%s1272 + $0x50] sm:$0xff]
      %v1284 = vld [vmem:[%s1272 + $0x58] sm:$0xff]
      %v1285 = vld [vmem:[%s1272 + $0x60] sm:$0xff]
      %v1286 = vld [vmem:[%s1272 + $0x68] sm:$0xff]
      %v1287 = vld [vmem:[%s1272 + $0x70] sm:$0xff]
      %v1288 = vld [vmem:[%s1272 + $0x78] sm:$0xff]
      %v1289 = vld [vmem:[%s1272 + $0x80] sm:$0xff]
      %v1290 = vld [vmem:[%s1272 + $0x88] sm:$0xff]
      %v1291 = vld [vmem:[%s1272 + $0x90] sm:$0xff]
      %v1292 = vld [vmem:[%s1272 + $0x98] sm:$0xff]
      %v1293 = vld [vmem:[%s1272 + $0xa0] sm:$0xff]
      %v1294 = vld [vmem:[%s1272 + $0xa8] sm:$0xff]
      %v1295 = vld [vmem:[%s1272 + $0xb0] sm:$0xff]
      %v1296 = vld [vmem:[%s1272 + $0xb8] sm:$0xff]
      %v1297 = vld [vmem:[%s1272 + $0xc0] sm:$0xff]
      %v1298 = vld [vmem:[%s1272 + $0xc8] sm:$0xff]
      %v1299 = vld [vmem:[%s1272 + $0xd0] sm:$0xff]
      %v1300 = vld [vmem:[%s1272 + $0xd8] sm:$0xff]
      %v1301 = vld [vmem:[%s1272 + $0xe0] sm:$0xff]
      %v1302 = vld [vmem:[%s1272 + $0xe8] sm:$0xff]
      %v1303 = vld [vmem:[%s1272 + $0xf0] sm:$0xff]
      %v1304 = vld [vmem:[%s1272 + $0xf8] sm:$0xff]
      %v1305 = vld [vmem:[%s1272 + $0x100] sm:$0xff]
      %v1306 = vld [vmem:[%s1272 + $0x108] sm:$0xff]
      %v1307 = vld [vmem:[%s1272 + $0x110] sm:$0xff]
      %v1308 = vld [vmem:[%s1272 + $0x118] sm:$0xff]
      %v1309 = vld [vmem:[%s1272 + $0x120] sm:$0xff]
      %v1310 = vld [vmem:[%s1272 + $0x128] sm:$0xff]
      %v1311 = vld [vmem:[%s1272 + $0x130] sm:$0xff]
      %v1312 = vld [vmem:[%s1272 + $0x138] sm:$0xff]
      %v1313 = vld [vmem:[%s1272 + $0x140] sm:$0xff]
      %v1314 = vld [vmem:[%s1272 + $0x148] sm:$0xff]
      %v1315 = vld [vmem:[%s1272 + $0x150] sm:$0xff]
      %v1316 = vld [vmem:[%s1272 + $0x158] sm:$0xff]
      %v1317 = vld [vmem:[%s1272 + $0x160] sm:$0xff]
      %v1318 = vld [vmem:[%s1272 + $0x168] sm:$0xff]
      %v1319 = vld [vmem:[%s1272 + $0x170] sm:$0xff]
      %v1320 = vld [vmem:[%s1272 + $0x178] sm:$0xff]
      %v1321 = vld [vmem:[%s1272 + $0x180] sm:$0xff]
      %v1322 = vld [vmem:[%s1272 + $0x188] sm:$0xff]
      %v1323 = vld [vmem:[%s1272 + $0x190] sm:$0xff]
      %v1324 = vld [vmem:[%s1272 + $0x198] sm:$0xff]
      %v1325 = vld [vmem:[%s1272 + $0x1a0] sm:$0xff]
      %v1326 = vld [vmem:[%s1272 + $0x1a8] sm:$0xff]
      %v1327 = vld [vmem:[%s1272 + $0x1b0] sm:$0xff]
      %v1328 = vld [vmem:[%s1272 + $0x1b8] sm:$0xff]
      %v1329 = vld [vmem:[%s1272 + $0x1c0] sm:$0xff]
      %v1330 = vld [vmem:[%s1272 + $0x1c8] sm:$0xff]
      %v1331 = vld [vmem:[%s1272 + $0x1d0] sm:$0xff]
      %v1332 = vld [vmem:[%s1272 + $0x1d8] sm:$0xff]
      %v1333 = vld [vmem:[%s1272 + $0x1e0] sm:$0xff]
      %v1334 = vld [vmem:[%s1272 + $0x1e8] sm:$0xff]
      %v1335 = vld [vmem:[%s1272 + $0x1f0] sm:$0xff]
      %v1336 = vld [vmem:[%s1272 + $0x1f8] sm:$0xff]
      %vm1341 = vcmask 1042432
      %v1342 = vrot.slane %v1268, 5
      %v1343 = vrot.slane %v1270, 5
      %v1344 = vsel %vm1341, %v1342, %v1343
      %v1345 = vrot.slane %v1269, 5
      %v1346 = vrot.slane %v1271, 5
      %v1347 = vsel %vm1341, %v1345, %v1346
      %1350 = vmatprep.subr.mxu0 %v1304
      %1351 = vmatpush1.msra.mxu0 %v1303
      %1352 = vmatprep.subr.mxu0 %v1302
      %1353 = vmatpush1.msra.mxu0 %v1301
      %1354 = vmatprep.subr.mxu0 %v1300
      %1355 = vmatpush1.msra.mxu0 %v1299
      %1356 = vmatprep.subr.mxu0 %v1298
      %1357 = vmatpush1.msra.mxu0 %v1297
      %1358 = vmatprep.subr.mxu0 %v1296
      %1359 = vmatpush1.msra.mxu0 %v1295
      %1360 = vmatprep.subr.mxu0 %v1294
      %1361 = vmatpush1.msra.mxu0 %v1293
      %1362 = vmatprep.subr.mxu0 %v1292
      %1363 = vmatpush1.msra.mxu0 %v1291
      %1364 = vmatprep.subr.mxu0 %v1290
      %1365 = vmatpush1.msra.mxu0 %v1289
      %1366 = vmatprep.subr.mxu0 %v1288
      %1367 = vmatpush1.msra.mxu0 %v1287
      %1368 = vmatprep.subr.mxu0 %v1286
      %1369 = vmatpush1.msra.mxu0 %v1285
      %1370 = vmatprep.subr.mxu0 %v1284
      %1371 = vmatpush1.msra.mxu0 %v1283
      %1372 = vmatprep.subr.mxu0 %v1282
      %1373 = vmatpush1.msra.mxu0 %v1281
      %1374 = vmatprep.subr.mxu0 %v1280
      %1375 = vmatpush1.msra.mxu0 %v1279
      %1376 = vmatprep.subr.mxu0 %v1278
      %1377 = vmatpush1.msra.mxu0 %v1277
      %1378 = vmatprep.subr.mxu0 %v1276
      %1379 = vmatpush1.msra.mxu0 %v1275
      %1380 = vmatprep.subr.mxu0 %v1274
      %1381 = vmatpush1.msra.mxu0 %v1273
      %1382 = vmatprep.subr.mxu0 %v1336
      %1383 = vmatpush2.msra.mxu0 %v1335
      %1384 = vmatprep.subr.mxu0 %v1334
      %1385 = vmatpush2.msra.mxu0 %v1333
      %1386 = vmatprep.subr.mxu0 %v1332
      %1387 = vmatpush2.msra.mxu0 %v1331
      %1388 = vmatprep.subr.mxu0 %v1330
      %1389 = vmatpush2.msra.mxu0 %v1329
      %1390 = vmatprep.subr.mxu0 %v1328
      %1391 = vmatpush2.msra.mxu0 %v1327
      %1392 = vmatprep.subr.mxu0 %v1326
      %1393 = vmatpush2.msra.mxu0 %v1325
      %1394 = vmatprep.subr.mxu0 %v1324
      %1395 = vmatpush2.msra.mxu0 %v1323
      %1396 = vmatprep.subr.mxu0 %v1322
      %1397 = vmatpush2.msra.mxu0 %v1321
      %1398 = vmatprep.subr.mxu0 %v1320
      %1399 = vmatpush2.msra.mxu0 %v1319
      %1400 = vmatprep.subr.mxu0 %v1318
      %1401 = vmatpush2.msra.mxu0 %v1317
      %1402 = vmatprep.subr.mxu0 %v1316
      %1403 = vmatpush2.msra.mxu0 %v1315
      %1404 = vmatprep.subr.mxu0 %v1314
      %1405 = vmatpush2.msra.mxu0 %v1313
      %1406 = vmatprep.subr.mxu0 %v1312
      %1407 = vmatpush2.msra.mxu0 %v1311
      %1408 = vmatprep.subr.mxu0 %v1310
      %1409 = vmatpush2.msra.mxu0 %v1309
      %1410 = vmatprep.subr.mxu0 %v1308
      %1411 = vmatpush2.msra.mxu0 %v1307
      %1412 = vmatprep.subr.mxu0 %v1306
      %1413 = vmatpush2.msra.mxu0 %v1305
      %1414 = vmatprep.mubr.f32.mxu0 %v1347
      %1415 = vmatmul.mubr.f32.gmra.mxu0 %v1344
      %v1416 = vpop.f32.mrf.mxu0
      %v1417 = vadd.f32 0.0, %v1416
      %v1418 = vpop.f32.mrf.mxu0
      %v1419 = vadd.f32 0.0, %v1418
      %1420 = vdwg.mxu0
      %v1421 = vadd.f32 %v1266, %v1417
      %v1422 = vadd.f32 %v1267, %v1419
      %v1423 = vld [vmem:[#allocation2] sm:$0xc0]
      %v1424 = vld [vmem:[#allocation2 + $0x8] sm:$0xc0]
      %v1425 = vld [vmem:[#allocation2 + $0x10] sm:$0x3f]
      %v1426 = vld [vmem:[#allocation2 + $0x18] sm:$0x3f]
      %s1427 = scalar_lea.vmem %s3, 3072
      %v1428 = vld [vmem:[%s1427] sm:$0xff]
      %v1429 = vld [vmem:[%s1427 + $0x8] sm:$0xff]
      %v1430 = vld [vmem:[%s1427 + $0x10] sm:$0xff]
      %v1431 = vld [vmem:[%s1427 + $0x18] sm:$0xff]
      %v1432 = vld [vmem:[%s1427 + $0x20] sm:$0xff]
      %v1433 = vld [vmem:[%s1427 + $0x28] sm:$0xff]
      %v1434 = vld [vmem:[%s1427 + $0x30] sm:$0xff]
      %v1435 = vld [vmem:[%s1427 + $0x38] sm:$0xff]
      %v1436 = vld [vmem:[%s1427 + $0x40] sm:$0xff]
      %v1437 = vld [vmem:[%s1427 + $0x48] sm:$0xff]
      %v1438 = vld [vmem:[%s1427 + $0x50] sm:$0xff]
      %v1439 = vld [vmem:[%s1427 + $0x58] sm:$0xff]
      %v1440 = vld [vmem:[%s1427 + $0x60] sm:$0xff]
      %v1441 = vld [vmem:[%s1427 + $0x68] sm:$0xff]
      %v1442 = vld [vmem:[%s1427 + $0x70] sm:$0xff]
      %v1443 = vld [vmem:[%s1427 + $0x78] sm:$0xff]
      %v1444 = vld [vmem:[%s1427 + $0x80] sm:$0xff]
      %v1445 = vld [vmem:[%s1427 + $0x88] sm:$0xff]
      %v1446 = vld [vmem:[%s1427 + $0x90] sm:$0xff]
      %v1447 = vld [vmem:[%s1427 + $0x98] sm:$0xff]
      %v1448 = vld [vmem:[%s1427 + $0xa0] sm:$0xff]
      %v1449 = vld [vmem:[%s1427 + $0xa8] sm:$0xff]
      %v1450 = vld [vmem:[%s1427 + $0xb0] sm:$0xff]
      %v1451 = vld [vmem:[%s1427 + $0xb8] sm:$0xff]
      %v1452 = vld [vmem:[%s1427 + $0xc0] sm:$0xff]
      %v1453 = vld [vmem:[%s1427 + $0xc8] sm:$0xff]
      %v1454 = vld [vmem:[%s1427 + $0xd0] sm:$0xff]
      %v1455 = vld [vmem:[%s1427 + $0xd8] sm:$0xff]
      %v1456 = vld [vmem:[%s1427 + $0xe0] sm:$0xff]
      %v1457 = vld [vmem:[%s1427 + $0xe8] sm:$0xff]
      %v1458 = vld [vmem:[%s1427 + $0xf0] sm:$0xff]
      %v1459 = vld [vmem:[%s1427 + $0xf8] sm:$0xff]
      %v1460 = vld [vmem:[%s1427 + $0x100] sm:$0xff]
      %v1461 = vld [vmem:[%s1427 + $0x108] sm:$0xff]
      %v1462 = vld [vmem:[%s1427 + $0x110] sm:$0xff]
      %v1463 = vld [vmem:[%s1427 + $0x118] sm:$0xff]
      %v1464 = vld [vmem:[%s1427 + $0x120] sm:$0xff]
      %v1465 = vld [vmem:[%s1427 + $0x128] sm:$0xff]
      %v1466 = vld [vmem:[%s1427 + $0x130] sm:$0xff]
      %v1467 = vld [vmem:[%s1427 + $0x138] sm:$0xff]
      %v1468 = vld [vmem:[%s1427 + $0x140] sm:$0xff]
      %v1469 = vld [vmem:[%s1427 + $0x148] sm:$0xff]
      %v1470 = vld [vmem:[%s1427 + $0x150] sm:$0xff]
      %v1471 = vld [vmem:[%s1427 + $0x158] sm:$0xff]
      %v1472 = vld [vmem:[%s1427 + $0x160] sm:$0xff]
      %v1473 = vld [vmem:[%s1427 + $0x168] sm:$0xff]
      %v1474 = vld [vmem:[%s1427 + $0x170] sm:$0xff]
      %v1475 = vld [vmem:[%s1427 + $0x178] sm:$0xff]
      %v1476 = vld [vmem:[%s1427 + $0x180] sm:$0xff]
      %v1477 = vld [vmem:[%s1427 + $0x188] sm:$0xff]
      %v1478 = vld [vmem:[%s1427 + $0x190] sm:$0xff]
      %v1479 = vld [vmem:[%s1427 + $0x198] sm:$0xff]
      %v1480 = vld [vmem:[%s1427 + $0x1a0] sm:$0xff]
      %v1481 = vld [vmem:[%s1427 + $0x1a8] sm:$0xff]
      %v1482 = vld [vmem:[%s1427 + $0x1b0] sm:$0xff]
      %v1483 = vld [vmem:[%s1427 + $0x1b8] sm:$0xff]
      %v1484 = vld [vmem:[%s1427 + $0x1c0] sm:$0xff]
      %v1485 = vld [vmem:[%s1427 + $0x1c8] sm:$0xff]
      %v1486 = vld [vmem:[%s1427 + $0x1d0] sm:$0xff]
      %v1487 = vld [vmem:[%s1427 + $0x1d8] sm:$0xff]
      %v1488 = vld [vmem:[%s1427 + $0x1e0] sm:$0xff]
      %v1489 = vld [vmem:[%s1427 + $0x1e8] sm:$0xff]
      %v1490 = vld [vmem:[%s1427 + $0x1f0] sm:$0xff]
      %v1491 = vld [vmem:[%s1427 + $0x1f8] sm:$0xff]
      %vm1496 = vcmask 1041408
      %v1497 = vrot.slane %v1423, 6
      %v1498 = vrot.slane %v1425, 6
      %v1499 = vsel %vm1496, %v1497, %v1498
      %v1500 = vrot.slane %v1424, 6
      %v1501 = vrot.slane %v1426, 6
      %v1502 = vsel %vm1496, %v1500, %v1501
      %1505 = vmatprep.subr.mxu0 %v1459
      %1506 = vmatpush1.msra.mxu0 %v1458
      %1507 = vmatprep.subr.mxu0 %v1457
      %1508 = vmatpush1.msra.mxu0 %v1456
      %1509 = vmatprep.subr.mxu0 %v1455
      %1510 = vmatpush1.msra.mxu0 %v1454
      %1511 = vmatprep.subr.mxu0 %v1453
      %1512 = vmatpush1.msra.mxu0 %v1452
      %1513 = vmatprep.subr.mxu0 %v1451
      %1514 = vmatpush1.msra.mxu0 %v1450
      %1515 = vmatprep.subr.mxu0 %v1449
      %1516 = vmatpush1.msra.mxu0 %v1448
      %1517 = vmatprep.subr.mxu0 %v1447
      %1518 = vmatpush1.msra.mxu0 %v1446
      %1519 = vmatprep.subr.mxu0 %v1445
      %1520 = vmatpush1.msra.mxu0 %v1444
      %1521 = vmatprep.subr.mxu0 %v1443
      %1522 = vmatpush1.msra.mxu0 %v1442
      %1523 = vmatprep.subr.mxu0 %v1441
      %1524 = vmatpush1.msra.mxu0 %v1440
      %1525 = vmatprep.subr.mxu0 %v1439
      %1526 = vmatpush1.msra.mxu0 %v1438
      %1527 = vmatprep.subr.mxu0 %v1437
      %1528 = vmatpush1.msra.mxu0 %v1436
      %1529 = vmatprep.subr.mxu0 %v1435
      %1530 = vmatpush1.msra.mxu0 %v1434
      %1531 = vmatprep.subr.mxu0 %v1433
      %1532 = vmatpush1.msra.mxu0 %v1432
      %1533 = vmatprep.subr.mxu0 %v1431
      %1534 = vmatpush1.msra.mxu0 %v1430
      %1535 = vmatprep.subr.mxu0 %v1429
      %1536 = vmatpush1.msra.mxu0 %v1428
      %1537 = vmatprep.subr.mxu0 %v1491
      %1538 = vmatpush2.msra.mxu0 %v1490
      %1539 = vmatprep.subr.mxu0 %v1489
      %1540 = vmatpush2.msra.mxu0 %v1488
      %1541 = vmatprep.subr.mxu0 %v1487
      %1542 = vmatpush2.msra.mxu0 %v1486
      %1543 = vmatprep.subr.mxu0 %v1485
      %1544 = vmatpush2.msra.mxu0 %v1484
      %1545 = vmatprep.subr.mxu0 %v1483
      %1546 = vmatpush2.msra.mxu0 %v1482
      %1547 = vmatprep.subr.mxu0 %v1481
      %1548 = vmatpush2.msra.mxu0 %v1480
      %1549 = vmatprep.subr.mxu0 %v1479
      %1550 = vmatpush2.msra.mxu0 %v1478
      %1551 = vmatprep.subr.mxu0 %v1477
      %1552 = vmatpush2.msra.mxu0 %v1476
      %1553 = vmatprep.subr.mxu0 %v1475
      %1554 = vmatpush2.msra.mxu0 %v1474
      %1555 = vmatprep.subr.mxu0 %v1473
      %1556 = vmatpush2.msra.mxu0 %v1472
      %1557 = vmatprep.subr.mxu0 %v1471
      %1558 = vmatpush2.msra.mxu0 %v1470
      %1559 = vmatprep.subr.mxu0 %v1469
      %1560 = vmatpush2.msra.mxu0 %v1468
      %1561 = vmatprep.subr.mxu0 %v1467
      %1562 = vmatpush2.msra.mxu0 %v1466
      %1563 = vmatprep.subr.mxu0 %v1465
      %1564 = vmatpush2.msra.mxu0 %v1464
      %1565 = vmatprep.subr.mxu0 %v1463
      %1566 = vmatpush2.msra.mxu0 %v1462
      %1567 = vmatprep.subr.mxu0 %v1461
      %1568 = vmatpush2.msra.mxu0 %v1460
      %1569 = vmatprep.mubr.f32.mxu0 %v1502
      %1570 = vmatmul.mubr.f32.gmra.mxu0 %v1499
      %v1571 = vpop.f32.mrf.mxu0
      %v1572 = vadd.f32 0.0, %v1571
      %v1573 = vpop.f32.mrf.mxu0
      %v1574 = vadd.f32 0.0, %v1573
      %1575 = vdwg.mxu0
      %v1576 = vadd.f32 %v1421, %v1572
      %v1577 = vadd.f32 %v1422, %v1574
      %v1578 = vld [vmem:[#allocation2] sm:$0x80]
      %v1579 = vld [vmem:[#allocation2 + $0x8] sm:$0x80]
      %v1580 = vld [vmem:[#allocation2 + $0x10] sm:$0x7f]
      %v1581 = vld [vmem:[#allocation2 + $0x18] sm:$0x7f]
      %s1582 = scalar_lea.vmem %s3, 3584
      %v1583 = vld [vmem:[%s1582] sm:$0xff]
      %v1584 = vld [vmem:[%s1582 + $0x8] sm:$0xff]
      %v1585 = vld [vmem:[%s1582 + $0x10] sm:$0xff]
      %v1586 = vld [vmem:[%s1582 + $0x18] sm:$0xff]
      %v1587 = vld [vmem:[%s1582 + $0x20] sm:$0xff]
      %v1588 = vld [vmem:[%s1582 + $0x28] sm:$0xff]
      %v1589 = vld [vmem:[%s1582 + $0x30] sm:$0xff]
      %v1590 = vld [vmem:[%s1582 + $0x38] sm:$0xff]
      %v1591 = vld [vmem:[%s1582 + $0x40] sm:$0xff]
      %v1592 = vld [vmem:[%s1582 + $0x48] sm:$0xff]
      %v1593 = vld [vmem:[%s1582 + $0x50] sm:$0xff]
      %v1594 = vld [vmem:[%s1582 + $0x58] sm:$0xff]
      %v1595 = vld [vmem:[%s1582 + $0x60] sm:$0xff]
      %v1596 = vld [vmem:[%s1582 + $0x68] sm:$0xff]
      %v1597 = vld [vmem:[%s1582 + $0x70] sm:$0xff]
      %v1598 = vld [vmem:[%s1582 + $0x78] sm:$0xff]
      %v1599 = vld [vmem:[%s1582 + $0x80] sm:$0xff]
      %v1600 = vld [vmem:[%s1582 + $0x88] sm:$0xff]
      %v1601 = vld [vmem:[%s1582 + $0x90] sm:$0xff]
      %v1602 = vld [vmem:[%s1582 + $0x98] sm:$0xff]
      %v1603 = vld [vmem:[%s1582 + $0xa0] sm:$0xff]
      %v1604 = vld [vmem:[%s1582 + $0xa8] sm:$0xff]
      %v1605 = vld [vmem:[%s1582 + $0xb0] sm:$0xff]
      %v1606 = vld [vmem:[%s1582 + $0xb8] sm:$0xff]
      %v1607 = vld [vmem:[%s1582 + $0xc0] sm:$0xff]
      %v1608 = vld [vmem:[%s1582 + $0xc8] sm:$0xff]
      %v1609 = vld [vmem:[%s1582 + $0xd0] sm:$0xff]
      %v1610 = vld [vmem:[%s1582 + $0xd8] sm:$0xff]
      %v1611 = vld [vmem:[%s1582 + $0xe0] sm:$0xff]
      %v1612 = vld [vmem:[%s1582 + $0xe8] sm:$0xff]
      %v1613 = vld [vmem:[%s1582 + $0xf0] sm:$0xff]
      %v1614 = vld [vmem:[%s1582 + $0xf8] sm:$0xff]
      %v1615 = vld [vmem:[%s1582 + $0x100] sm:$0xff]
      %v1616 = vld [vmem:[%s1582 + $0x108] sm:$0xff]
      %v1617 = vld [vmem:[%s1582 + $0x110] sm:$0xff]
      %v1618 = vld [vmem:[%s1582 + $0x118] sm:$0xff]
      %v1619 = vld [vmem:[%s1582 + $0x120] sm:$0xff]
      %v1620 = vld [vmem:[%s1582 + $0x128] sm:$0xff]
      %v1621 = vld [vmem:[%s1582 + $0x130] sm:$0xff]
      %v1622 = vld [vmem:[%s1582 + $0x138] sm:$0xff]
      %v1623 = vld [vmem:[%s1582 + $0x140] sm:$0xff]
      %v1624 = vld [vmem:[%s1582 + $0x148] sm:$0xff]
      %v1625 = vld [vmem:[%s1582 + $0x150] sm:$0xff]
      %v1626 = vld [vmem:[%s1582 + $0x158] sm:$0xff]
      %v1627 = vld [vmem:[%s1582 + $0x160] sm:$0xff]
      %v1628 = vld [vmem:[%s1582 + $0x168] sm:$0xff]
      %v1629 = vld [vmem:[%s1582 + $0x170] sm:$0xff]
      %v1630 = vld [vmem:[%s1582 + $0x178] sm:$0xff]
      %v1631 = vld [vmem:[%s1582 + $0x180] sm:$0xff]
      %v1632 = vld [vmem:[%s1582 + $0x188] sm:$0xff]
      %v1633 = vld [vmem:[%s1582 + $0x190] sm:$0xff]
      %v1634 = vld [vmem:[%s1582 + $0x198] sm:$0xff]
      %v1635 = vld [vmem:[%s1582 + $0x1a0] sm:$0xff]
      %v1636 = vld [vmem:[%s1582 + $0x1a8] sm:$0xff]
      %v1637 = vld [vmem:[%s1582 + $0x1b0] sm:$0xff]
      %v1638 = vld [vmem:[%s1582 + $0x1b8] sm:$0xff]
      %v1639 = vld [vmem:[%s1582 + $0x1c0] sm:$0xff]
      %v1640 = vld [vmem:[%s1582 + $0x1c8] sm:$0xff]
      %v1641 = vld [vmem:[%s1582 + $0x1d0] sm:$0xff]
      %v1642 = vld [vmem:[%s1582 + $0x1d8] sm:$0xff]
      %v1643 = vld [vmem:[%s1582 + $0x1e0] sm:$0xff]
      %v1644 = vld [vmem:[%s1582 + $0x1e8] sm:$0xff]
      %v1645 = vld [vmem:[%s1582 + $0x1f0] sm:$0xff]
      %v1646 = vld [vmem:[%s1582 + $0x1f8] sm:$0xff]
      %vm1651 = vcmask 1040384
      %v1652 = vrot.slane %v1578, 7
      %v1653 = vrot.slane %v1580, 7
      %v1654 = vsel %vm1651, %v1652, %v1653
      %v1655 = vrot.slane %v1579, 7
      %v1656 = vrot.slane %v1581, 7
      %v1657 = vsel %vm1651, %v1655, %v1656
      %1660 = vmatprep.subr.mxu0 %v1614
      %1661 = vmatpush1.msra.mxu0 %v1613
      %1662 = vmatprep.subr.mxu0 %v1612
      %1663 = vmatpush1.msra.mxu0 %v1611
      %1664 = vmatprep.subr.mxu0 %v1610
      %1665 = vmatpush1.msra.mxu0 %v1609
      %1666 = vmatprep.subr.mxu0 %v1608
      %1667 = vmatpush1.msra.mxu0 %v1607
      %1668 = vmatprep.subr.mxu0 %v1606
      %1669 = vmatpush1.msra.mxu0 %v1605
      %1670 = vmatprep.subr.mxu0 %v1604
      %1671 = vmatpush1.msra.mxu0 %v1603
      %1672 = vmatprep.subr.mxu0 %v1602
      %1673 = vmatpush1.msra.mxu0 %v1601
      %1674 = vmatprep.subr.mxu0 %v1600
      %1675 = vmatpush1.msra.mxu0 %v1599
      %1676 = vmatprep.subr.mxu0 %v1598
      %1677 = vmatpush1.msra.mxu0 %v1597
      %1678 = vmatprep.subr.mxu0 %v1596
      %1679 = vmatpush1.msra.mxu0 %v1595
      %1680 = vmatprep.subr.mxu0 %v1594
      %1681 = vmatpush1.msra.mxu0 %v1593
      %1682 = vmatprep.subr.mxu0 %v1592
      %1683 = vmatpush1.msra.mxu0 %v1591
      %1684 = vmatprep.subr.mxu0 %v1590
      %1685 = vmatpush1.msra.mxu0 %v1589
      %1686 = vmatprep.subr.mxu0 %v1588
      %1687 = vmatpush1.msra.mxu0 %v1587
      %1688 = vmatprep.subr.mxu0 %v1586
      %1689 = vmatpush1.msra.mxu0 %v1585
      %1690 = vmatprep.subr.mxu0 %v1584
      %1691 = vmatpush1.msra.mxu0 %v1583
      %1692 = vmatprep.subr.mxu0 %v1646
      %1693 = vmatpush2.msra.mxu0 %v1645
      %1694 = vmatprep.subr.mxu0 %v1644
      %1695 = vmatpush2.msra.mxu0 %v1643
      %1696 = vmatprep.subr.mxu0 %v1642
      %1697 = vmatpush2.msra.mxu0 %v1641
      %1698 = vmatprep.subr.mxu0 %v1640
      %1699 = vmatpush2.msra.mxu0 %v1639
      %1700 = vmatprep.subr.mxu0 %v1638
      %1701 = vmatpush2.msra.mxu0 %v1637
      %1702 = vmatprep.subr.mxu0 %v1636
      %1703 = vmatpush2.msra.mxu0 %v1635
      %1704 = vmatprep.subr.mxu0 %v1634
      %1705 = vmatpush2.msra.mxu0 %v1633
      %1706 = vmatprep.subr.mxu0 %v1632
      %1707 = vmatpush2.msra.mxu0 %v1631
      %1708 = vmatprep.subr.mxu0 %v1630
      %1709 = vmatpush2.msra.mxu0 %v1629
      %1710 = vmatprep.subr.mxu0 %v1628
      %1711 = vmatpush2.msra.mxu0 %v1627
      %1712 = vmatprep.subr.mxu0 %v1626
      %1713 = vmatpush2.msra.mxu0 %v1625
      %1714 = vmatprep.subr.mxu0 %v1624
      %1715 = vmatpush2.msra.mxu0 %v1623
      %1716 = vmatprep.subr.mxu0 %v1622
      %1717 = vmatpush2.msra.mxu0 %v1621
      %1718 = vmatprep.subr.mxu0 %v1620
      %1719 = vmatpush2.msra.mxu0 %v1619
      %1720 = vmatprep.subr.mxu0 %v1618
      %1721 = vmatpush2.msra.mxu0 %v1617
      %1722 = vmatprep.subr.mxu0 %v1616
      %1723 = vmatpush2.msra.mxu0 %v1615
      %1724 = vmatprep.mubr.f32.mxu0 %v1657
      %1725 = vmatmul.mubr.f32.gmra.mxu0 %v1654
      %v1726 = vpop.f32.mrf.mxu0
      %v1727 = vadd.f32 0.0, %v1726
      %v1728 = vpop.f32.mrf.mxu0
      %v1729 = vadd.f32 0.0, %v1728
      %1730 = vdwg.mxu0
      %v1731 = vadd.f32 %v1576, %v1727
      %v1732 = vadd.f32 %v1577, %v1729
      %v1733 = vld [vmem:[#allocation2 + $0x10] sm:$0xff]
      %v1734 = vld [vmem:[#allocation2 + $0x18] sm:$0xff]
      %s1735 = scalar_lea.vmem %s3, 4096
      %v1736 = vld [vmem:[%s1735] sm:$0xff]
      %v1737 = vld [vmem:[%s1735 + $0x8] sm:$0xff]
      %v1738 = vld [vmem:[%s1735 + $0x10] sm:$0xff]
      %v1739 = vld [vmem:[%s1735 + $0x18] sm:$0xff]
      %v1740 = vld [vmem:[%s1735 + $0x20] sm:$0xff]
      %v1741 = vld [vmem:[%s1735 + $0x28] sm:$0xff]
      %v1742 = vld [vmem:[%s1735 + $0x30] sm:$0xff]
      %v1743 = vld [vmem:[%s1735 + $0x38] sm:$0xff]
      %v1744 = vld [vmem:[%s1735 + $0x40] sm:$0xff]
      %v1745 = vld [vmem:[%s1735 + $0x48] sm:$0xff]
      %v1746 = vld [vmem:[%s1735 + $0x50] sm:$0xff]
      %v1747 = vld [vmem:[%s1735 + $0x58] sm:$0xff]
      %v1748 = vld [vmem:[%s1735 + $0x60] sm:$0xff]
      %v1749 = vld [vmem:[%s1735 + $0x68] sm:$0xff]
      %v1750 = vld [vmem:[%s1735 + $0x70] sm:$0xff]
      %v1751 = vld [vmem:[%s1735 + $0x78] sm:$0xff]
      %v1752 = vld [vmem:[%s1735 + $0x80] sm:$0xff]
      %v1753 = vld [vmem:[%s1735 + $0x88] sm:$0xff]
      %v1754 = vld [vmem:[%s1735 + $0x90] sm:$0xff]
      %v1755 = vld [vmem:[%s1735 + $0x98] sm:$0xff]
      %v1756 = vld [vmem:[%s1735 + $0xa0] sm:$0xff]
      %v1757 = vld [vmem:[%s1735 + $0xa8] sm:$0xff]
      %v1758 = vld [vmem:[%s1735 + $0xb0] sm:$0xff]
      %v1759 = vld [vmem:[%s1735 + $0xb8] sm:$0xff]
      %v1760 = vld [vmem:[%s1735 + $0xc0] sm:$0xff]
      %v1761 = vld [vmem:[%s1735 + $0xc8] sm:$0xff]
      %v1762 = vld [vmem:[%s1735 + $0xd0] sm:$0xff]
      %v1763 = vld [vmem:[%s1735 + $0xd8] sm:$0xff]
      %v1764 = vld [vmem:[%s1735 + $0xe0] sm:$0xff]
      %v1765 = vld [vmem:[%s1735 + $0xe8] sm:$0xff]
      %v1766 = vld [vmem:[%s1735 + $0xf0] sm:$0xff]
      %v1767 = vld [vmem:[%s1735 + $0xf8] sm:$0xff]
      %v1768 = vld [vmem:[%s1735 + $0x100] sm:$0xff]
      %v1769 = vld [vmem:[%s1735 + $0x108] sm:$0xff]
      %v1770 = vld [vmem:[%s1735 + $0x110] sm:$0xff]
      %v1771 = vld [vmem:[%s1735 + $0x118] sm:$0xff]
      %v1772 = vld [vmem:[%s1735 + $0x120] sm:$0xff]
      %v1773 = vld [vmem:[%s1735 + $0x128] sm:$0xff]
      %v1774 = vld [vmem:[%s1735 + $0x130] sm:$0xff]
      %v1775 = vld [vmem:[%s1735 + $0x138] sm:$0xff]
      %v1776 = vld [vmem:[%s1735 + $0x140] sm:$0xff]
      %v1777 = vld [vmem:[%s1735 + $0x148] sm:$0xff]
      %v1778 = vld [vmem:[%s1735 + $0x150] sm:$0xff]
      %v1779 = vld [vmem:[%s1735 + $0x158] sm:$0xff]
      %v1780 = vld [vmem:[%s1735 + $0x160] sm:$0xff]
      %v1781 = vld [vmem:[%s1735 + $0x168] sm:$0xff]
      %v1782 = vld [vmem:[%s1735 + $0x170] sm:$0xff]
      %v1783 = vld [vmem:[%s1735 + $0x178] sm:$0xff]
      %v1784 = vld [vmem:[%s1735 + $0x180] sm:$0xff]
      %v1785 = vld [vmem:[%s1735 + $0x188] sm:$0xff]
      %v1786 = vld [vmem:[%s1735 + $0x190] sm:$0xff]
      %v1787 = vld [vmem:[%s1735 + $0x198] sm:$0xff]
      %v1788 = vld [vmem:[%s1735 + $0x1a0] sm:$0xff]
      %v1789 = vld [vmem:[%s1735 + $0x1a8] sm:$0xff]
      %v1790 = vld [vmem:[%s1735 + $0x1b0] sm:$0xff]
      %v1791 = vld [vmem:[%s1735 + $0x1b8] sm:$0xff]
      %v1792 = vld [vmem:[%s1735 + $0x1c0] sm:$0xff]
      %v1793 = vld [vmem:[%s1735 + $0x1c8] sm:$0xff]
      %v1794 = vld [vmem:[%s1735 + $0x1d0] sm:$0xff]
      %v1795 = vld [vmem:[%s1735 + $0x1d8] sm:$0xff]
      %v1796 = vld [vmem:[%s1735 + $0x1e0] sm:$0xff]
      %v1797 = vld [vmem:[%s1735 + $0x1e8] sm:$0xff]
      %v1798 = vld [vmem:[%s1735 + $0x1f0] sm:$0xff]
      %v1799 = vld [vmem:[%s1735 + $0x1f8] sm:$0xff]
      %1800 = vmatprep.subr.mxu0 %v1767
      %1801 = vmatpush1.msra.mxu0 %v1766
      %1802 = vmatprep.subr.mxu0 %v1765
      %1803 = vmatpush1.msra.mxu0 %v1764
      %1804 = vmatprep.subr.mxu0 %v1763
      %1805 = vmatpush1.msra.mxu0 %v1762
      %1806 = vmatprep.subr.mxu0 %v1761
      %1807 = vmatpush1.msra.mxu0 %v1760
      %1808 = vmatprep.subr.mxu0 %v1759
      %1809 = vmatpush1.msra.mxu0 %v1758
      %1810 = vmatprep.subr.mxu0 %v1757
      %1811 = vmatpush1.msra.mxu0 %v1756
      %1812 = vmatprep.subr.mxu0 %v1755
      %1813 = vmatpush1.msra.mxu0 %v1754
      %1814 = vmatprep.subr.mxu0 %v1753
      %1815 = vmatpush1.msra.mxu0 %v1752
      %1816 = vmatprep.subr.mxu0 %v1751
      %1817 = vmatpush1.msra.mxu0 %v1750
      %1818 = vmatprep.subr.mxu0 %v1749
      %1819 = vmatpush1.msra.mxu0 %v1748
      %1820 = vmatprep.subr.mxu0 %v1747
      %1821 = vmatpush1.msra.mxu0 %v1746
      %1822 = vmatprep.subr.mxu0 %v1745
      %1823 = vmatpush1.msra.mxu0 %v1744
      %1824 = vmatprep.subr.mxu0 %v1743
      %1825 = vmatpush1.msra.mxu0 %v1742
      %1826 = vmatprep.subr.mxu0 %v1741
      %1827 = vmatpush1.msra.mxu0 %v1740
      %1828 = vmatprep.subr.mxu0 %v1739
      %1829 = vmatpush1.msra.mxu0 %v1738
      %1830 = vmatprep.subr.mxu0 %v1737
      %1831 = vmatpush1.msra.mxu0 %v1736
      %1832 = vmatprep.subr.mxu0 %v1799
      %1833 = vmatpush2.msra.mxu0 %v1798
      %1834 = vmatprep.subr.mxu0 %v1797
      %1835 = vmatpush2.msra.mxu0 %v1796
      %1836 = vmatprep.subr.mxu0 %v1795
      %1837 = vmatpush2.msra.mxu0 %v1794
      %1838 = vmatprep.subr.mxu0 %v1793
      %1839 = vmatpush2.msra.mxu0 %v1792
      %1840 = vmatprep.subr.mxu0 %v1791
      %1841 = vmatpush2.msra.mxu0 %v1790
      %1842 = vmatprep.subr.mxu0 %v1789
      %1843 = vmatpush2.msra.mxu0 %v1788
      %1844 = vmatprep.subr.mxu0 %v1787
      %1845 = vmatpush2.msra.mxu0 %v1786
      %1846 = vmatprep.subr.mxu0 %v1785
      %1847 = vmatpush2.msra.mxu0 %v1784
      %1848 = vmatprep.subr.mxu0 %v1783
      %1849 = vmatpush2.msra.mxu0 %v1782
      %1850 = vmatprep.subr.mxu0 %v1781
      %1851 = vmatpush2.msra.mxu0 %v1780
      %1852 = vmatprep.subr.mxu0 %v1779
      %1853 = vmatpush2.msra.mxu0 %v1778
      %1854 = vmatprep.subr.mxu0 %v1777
      %1855 = vmatpush2.msra.mxu0 %v1776
      %1856 = vmatprep.subr.mxu0 %v1775
      %1857 = vmatpush2.msra.mxu0 %v1774
      %1858 = vmatprep.subr.mxu0 %v1773
      %1859 = vmatpush2.msra.mxu0 %v1772
      %1860 = vmatprep.subr.mxu0 %v1771
      %1861 = vmatpush2.msra.mxu0 %v1770
      %1862 = vmatprep.subr.mxu0 %v1769
      %1863 = vmatpush2.msra.mxu0 %v1768
      %1864 = vmatprep.mubr.f32.mxu0 %v1734
      %1865 = vmatmul.mubr.f32.gmra.mxu0 %v1733
      %v1866 = vpop.f32.mrf.mxu0
      %v1867 = vadd.f32 0.0, %v1866
      %v1868 = vpop.f32.mrf.mxu0
      %v1869 = vadd.f32 0.0, %v1868
      %1870 = vdwg.mxu0
      %v1871 = vadd.f32 %v1731, %v1867
      %v1872 = vadd.f32 %v1732, %v1869
      %v1873 = vld [vmem:[%s293] sm:$0xff]
      %v1874 = vld [vmem:[%s293 + $0x8] sm:$0xff]
      %v1875 = vld [vmem:[%s4] sm:$0xff]
      %v1876 = vld [vmem:[%s4 + $0x8] sm:$0xff]
      %v1877 = vld [vmem:[%s4 + $0x10] sm:$0xff]
      %v1878 = vld [vmem:[%s4 + $0x18] sm:$0xff]
      %v1879 = vld [vmem:[%s4 + $0x20] sm:$0xff]
      %v1880 = vld [vmem:[%s4 + $0x28] sm:$0xff]
      %v1881 = vld [vmem:[%s4 + $0x30] sm:$0xff]
      %v1882 = vld [vmem:[%s4 + $0x38] sm:$0xff]
      %v1883 = vld [vmem:[%s4 + $0x40] sm:$0xff]
      %v1884 = vld [vmem:[%s4 + $0x48] sm:$0xff]
      %v1885 = vld [vmem:[%s4 + $0x50] sm:$0xff]
      %v1886 = vld [vmem:[%s4 + $0x58] sm:$0xff]
      %v1887 = vld [vmem:[%s4 + $0x60] sm:$0xff]
      %v1888 = vld [vmem:[%s4 + $0x68] sm:$0xff]
      %v1889 = vld [vmem:[%s4 + $0x70] sm:$0xff]
      %v1890 = vld [vmem:[%s4 + $0x78] sm:$0xff]
      %v1891 = vld [vmem:[%s4 + $0x80] sm:$0xff]
      %v1892 = vld [vmem:[%s4 + $0x88] sm:$0xff]
      %v1893 = vld [vmem:[%s4 + $0x90] sm:$0xff]
      %v1894 = vld [vmem:[%s4 + $0x98] sm:$0xff]
      %v1895 = vld [vmem:[%s4 + $0xa0] sm:$0xff]
      %v1896 = vld [vmem:[%s4 + $0xa8] sm:$0xff]
      %v1897 = vld [vmem:[%s4 + $0xb0] sm:$0xff]
      %v1898 = vld [vmem:[%s4 + $0xb8] sm:$0xff]
      %v1899 = vld [vmem:[%s4 + $0xc0] sm:$0xff]
      %v1900 = vld [vmem:[%s4 + $0xc8] sm:$0xff]
      %v1901 = vld [vmem:[%s4 + $0xd0] sm:$0xff]
      %v1902 = vld [vmem:[%s4 + $0xd8] sm:$0xff]
      %v1903 = vld [vmem:[%s4 + $0xe0] sm:$0xff]
      %v1904 = vld [vmem:[%s4 + $0xe8] sm:$0xff]
      %v1905 = vld [vmem:[%s4 + $0xf0] sm:$0xff]
      %v1906 = vld [vmem:[%s4 + $0xf8] sm:$0xff]
      %v1907 = vld [vmem:[%s4 + $0x100] sm:$0xff]
      %v1908 = vld [vmem:[%s4 + $0x108] sm:$0xff]
      %v1909 = vld [vmem:[%s4 + $0x110] sm:$0xff]
      %v1910 = vld [vmem:[%s4 + $0x118] sm:$0xff]
      %v1911 = vld [vmem:[%s4 + $0x120] sm:$0xff]
      %v1912 = vld [vmem:[%s4 + $0x128] sm:$0xff]
      %v1913 = vld [vmem:[%s4 + $0x130] sm:$0xff]
      %v1914 = vld [vmem:[%s4 + $0x138] sm:$0xff]
      %v1915 = vld [vmem:[%s4 + $0x140] sm:$0xff]
      %v1916 = vld [vmem:[%s4 + $0x148] sm:$0xff]
      %v1917 = vld [vmem:[%s4 + $0x150] sm:$0xff]
      %v1918 = vld [vmem:[%s4 + $0x158] sm:$0xff]
      %v1919 = vld [vmem:[%s4 + $0x160] sm:$0xff]
      %v1920 = vld [vmem:[%s4 + $0x168] sm:$0xff]
      %v1921 = vld [vmem:[%s4 + $0x170] sm:$0xff]
      %v1922 = vld [vmem:[%s4 + $0x178] sm:$0xff]
      %v1923 = vld [vmem:[%s4 + $0x180] sm:$0xff]
      %v1924 = vld [vmem:[%s4 + $0x188] sm:$0xff]
      %v1925 = vld [vmem:[%s4 + $0x190] sm:$0xff]
      %v1926 = vld [vmem:[%s4 + $0x198] sm:$0xff]
      %v1927 = vld [vmem:[%s4 + $0x1a0] sm:$0xff]
      %v1928 = vld [vmem:[%s4 + $0x1a8] sm:$0xff]
      %v1929 = vld [vmem:[%s4 + $0x1b0] sm:$0xff]
      %v1930 = vld [vmem:[%s4 + $0x1b8] sm:$0xff]
      %v1931 = vld [vmem:[%s4 + $0x1c0] sm:$0xff]
      %v1932 = vld [vmem:[%s4 + $0x1c8] sm:$0xff]
      %v1933 = vld [vmem:[%s4 + $0x1d0] sm:$0xff]
      %v1934 = vld [vmem:[%s4 + $0x1d8] sm:$0xff]
      %v1935 = vld [vmem:[%s4 + $0x1e0] sm:$0xff]
      %v1936 = vld [vmem:[%s4 + $0x1e8] sm:$0xff]
      %v1937 = vld [vmem:[%s4 + $0x1f0] sm:$0xff]
      %v1938 = vld [vmem:[%s4 + $0x1f8] sm:$0xff]
      %1939 = vmatprep.subr.mxu0 %v1906
      %1940 = vmatpush1.msra.mxu0 %v1905
      %1941 = vmatprep.subr.mxu0 %v1904
      %1942 = vmatpush1.msra.mxu0 %v1903
      %1943 = vmatprep.subr.mxu0 %v1902
      %1944 = vmatpush1.msra.mxu0 %v1901
      %1945 = vmatprep.subr.mxu0 %v1900
      %1946 = vmatpush1.msra.mxu0 %v1899
      %1947 = vmatprep.subr.mxu0 %v1898
      %1948 = vmatpush1.msra.mxu0 %v1897
      %1949 = vmatprep.subr.mxu0 %v1896
      %1950 = vmatpush1.msra.mxu0 %v1895
      %1951 = vmatprep.subr.mxu0 %v1894
      %1952 = vmatpush1.msra.mxu0 %v1893
      %1953 = vmatprep.subr.mxu0 %v1892
      %1954 = vmatpush1.msra.mxu0 %v1891
      %1955 = vmatprep.subr.mxu0 %v1890
      %1956 = vmatpush1.msra.mxu0 %v1889
      %1957 = vmatprep.subr.mxu0 %v1888
      %1958 = vmatpush1.msra.mxu0 %v1887
      %1959 = vmatprep.subr.mxu0 %v1886
      %1960 = vmatpush1.msra.mxu0 %v1885
      %1961 = vmatprep.subr.mxu0 %v1884
      %1962 = vmatpush1.msra.mxu0 %v1883
      %1963 = vmatprep.subr.mxu0 %v1882
      %1964 = vmatpush1.msra.mxu0 %v1881
      %1965 = vmatprep.subr.mxu0 %v1880
      %1966 = vmatpush1.msra.mxu0 %v1879
      %1967 = vmatprep.subr.mxu0 %v1878
      %1968 = vmatpush1.msra.mxu0 %v1877
      %1969 = vmatprep.subr.mxu0 %v1876
      %1970 = vmatpush1.msra.mxu0 %v1875
      %1971 = vmatprep.subr.mxu0 %v1938
      %1972 = vmatpush2.msra.mxu0 %v1937
      %1973 = vmatprep.subr.mxu0 %v1936
      %1974 = vmatpush2.msra.mxu0 %v1935
      %1975 = vmatprep.subr.mxu0 %v1934
      %1976 = vmatpush2.msra.mxu0 %v1933
      %1977 = vmatprep.subr.mxu0 %v1932
      %1978 = vmatpush2.msra.mxu0 %v1931
      %1979 = vmatprep.subr.mxu0 %v1930
      %1980 = vmatpush2.msra.mxu0 %v1929
      %1981 = vmatprep.subr.mxu0 %v1928
      %1982 = vmatpush2.msra.mxu0 %v1927
      %1983 = vmatprep.subr.mxu0 %v1926
      %1984 = vmatpush2.msra.mxu0 %v1925
      %1985 = vmatprep.subr.mxu0 %v1924
      %1986 = vmatpush2.msra.mxu0 %v1923
      %1987 = vmatprep.subr.mxu0 %v1922
      %1988 = vmatpush2.msra.mxu0 %v1921
      %1989 = vmatprep.subr.mxu0 %v1920
      %1990 = vmatpush2.msra.mxu0 %v1919
      %1991 = vmatprep.subr.mxu0 %v1918
      %1992 = vmatpush2.msra.mxu0 %v1917
      %1993 = vmatprep.subr.mxu0 %v1916
      %1994 = vmatpush2.msra.mxu0 %v1915
      %1995 = vmatprep.subr.mxu0 %v1914
      %1996 = vmatpush2.msra.mxu0 %v1913
      %1997 = vmatprep.subr.mxu0 %v1912
      %1998 = vmatpush2.msra.mxu0 %v1911
      %1999 = vmatprep.subr.mxu0 %v1910
      %2000 = vmatpush2.msra.mxu0 %v1909
      %2001 = vmatprep.subr.mxu0 %v1908
      %2002 = vmatpush2.msra.mxu0 %v1907
      %2003 = vmatprep.mubr.f32.mxu0 %v1874
      %2004 = vmatmul.mubr.f32.gmra.mxu0 %v1873
      %v2005 = vpop.f32.mrf.mxu0
      %v2006 = vadd.f32 0.0, %v2005
      %v2007 = vpop.f32.mrf.mxu0
      %v2008 = vadd.f32 0.0, %v2007
      %2009 = vdwg.mxu0
      %v2010 = vld [vmem:[%s6] ss:$2 sm:$0x3]
      %v2012 = vlaneseq
      %v2013 = vshrl.u32 %v2012, 7
      %v2014 = vsub.s32 0, %v2013
      %v2015 = vrot.slane %v2010, %v2014
      %v2016 = vlaneseq
      %v2017 = vshrl.u32 %v2016, 7
      %v2018 = vsub.s32 1, %v2017
      %v2019 = vrot.slane %v2010, %v2018
      %v2022 = vmul.f32 %v1871, %v2015
      %v2023 = vmul.f32 %v1872, %v2019
      %v2024 = vadd.f32 %v2022, %v2006
      %v2025 = vadd.f32 %v2023, %v2008
      %s2026 = scalar_lea.vmem %s6, 1
      %v2027 = vld [vmem:[%s2026] ss:$2 sm:$0x3]
      %v2029 = vlaneseq
      %v2030 = vshrl.u32 %v2029, 7
      %v2031 = vsub.s32 0, %v2030
      %v2032 = vrot.slane %v2027, %v2031
      %v2033 = vlaneseq
      %v2034 = vshrl.u32 %v2033, 7
      %v2035 = vsub.s32 1, %v2034
      %v2036 = vrot.slane %v2027, %v2035
      %v2039 = vadd.f32 %v2024, %v2032
      %v2040 = vadd.f32 %v2025, %v2036
      %v2041 = vmax.f32 %v2039, 0.0
      %v2042 = vmax.f32 %v2040, 0.0
      %2043 = vst [vmem:[%s298] sm:$0xff] %v2041
      %2044 = vst [vmem:[%s298 + $0x8] sm:$0xff] %v2042
      %p2045 = scmp.lt.s32.totalorder %s18, 1
      %s2046 = scalar_select %p2045, %s18, 1
      %s2047 = smul.addr %s2046, 2
      %s2048 = smul.addr %s2047, 8
      %s2049 = scalar_lea.vmem %s7, %s2048
      // Predicated region
      $region49: #{stgcn_block_forward.1} parent=47 // pred_check
        %p2050 = pneg %p193
      $region50: #{stgcn_block_forward.1} parent=47 // pred_check_branch
        %2052 = sbr.rel (%p2050) target = $region52
      $region51: #{stgcn_block_forward.1} parent=47 // pred_region
        _
      $region52: #{stgcn_block_forward.1} parent=47 // pred_fallthru
        _
    $region48: #{stgcn_block_forward.1} parent=5 // pred_fallthru
      _
    %p2053 = scmp.le.s32.totalorder 2, %s13
    // Predicated region
    $region53: #{stgcn_block_forward.1} parent=5 // pred_check
      %p2054 = pneg %p2053
    $region54: #{stgcn_block_forward.1} parent=5 // pred_check_branch
      %2056 = sbr.rel (%p2054) target = $region56
    $region55: #{stgcn_block_forward.1} parent=5 // pred_region
      %s2057 = ssub.s32 %s13, 2
      // Predicated region
      $region57: #{stgcn_block_forward.1} parent=55 // pred_check
        %p2058 = pneg %p199
      $region58: #{stgcn_block_forward.1} parent=55 // pred_check_branch
        %2060 = sbr.rel (%p2058) target = $region60
      $region59: #{stgcn_block_forward.1} parent=55 // pred_region
        %p2061 = scmp.lt.s32.totalorder %s19, 1
        %s2062 = scalar_select %p2061, %s19, 1
        %s2063 = smul.addr %s2062, 2
        %s2064 = smul.addr %s2063, 8
        %s2065 = scalar_lea.vmem %s7, %s2064
      $region60: #{stgcn_block_forward.1} parent=55 // pred_fallthru
        _
    $region56: #{stgcn_block_forward.1} parent=5 // pred_fallthru
      _
  $region6: #{stgcn_block_forward.1} parent=0 // loop_footer
    %s17 = sadd.s32 1, %s13
  $region7: #{stgcn_block_forward.1} parent=0 // loop_footer_branch
    %12 = sbr.rel target = $region3
  $region8: #{stgcn_block_forward.1} parent=0 // loop_exit
    _

</llo_original>
